<compile_context>
chip_gen: v6e
topology: v6e:2x2x1
jax: 0.10.0
libtpu: 0.0.40
codegen_flags: <defaults>
</compile_context>

<pallas_src>
import math

import jax
import jax.numpy as jnp
from jax import lax
from jax.experimental import pallas as pl
from jax.experimental.pallas import tpu as pltpu


# ----------------------------------------------------------------------------
# Pallas kernel: fused bidirectional GRU recurrence for one layer.
# Grid = (direction, time_block); direction is "parallel", time is "arbitrary".
# ----------------------------------------------------------------------------
def _make_bidir_gru_kernel(TB, n_tb, B, H, unroll):
    def kernel(lens_ref, gx_ref, whh_ref, bhh_ref, out_ref, h_ref):
        # lens_ref: (B, 1)  int32   valid lengths (resident, never re-DMA'd)
        # gx_ref:   (TB, B, 3H) f32 hoisted input projection (b_ih already folded in)
        # whh_ref:  (H, 3H) bf16    recurrent weights for this direction
        # bhh_ref:  (1, 3H) f32     recurrent bias for this direction
        # out_ref:  (TB, B, H) f32  this direction's half of the layer output
        # h_ref:    (B, H) f32      hidden-state carry across time blocks (scratch)
        d = pl.program_id(0)                      # 0 = forward, 1 = backward
        k = pl.program_id(1)                      # time-block step (reversed for bwd)
        fwd = d == 0
        tb = jnp.where(fwd, k, n_tb - 1 - k)      # actual time-block index
        t_base = tb * TB

        @pl.when(k == 0)
        def _():
            h_ref[...] = jnp.zeros_like(h_ref)    # h_0 = zeros per direction

        whh = whh_ref[...]                                        # (H, 3H) bf16
        bhh = jnp.broadcast_to(bhh_ref[...], (B, 3 * H))          # hoisted broadcast
        lens = lens_ref[...]                                      # (B, 1) int32

        def body(i, h):
            lt = jnp.where(fwd, i, TB - 1 - i)    # local step within the block
            t = t_base + lt                       # global timestep
            gx = gx_ref[lt]                       # (B, 3H) f32
            gh = jnp.dot(h.astype(jnp.bfloat16), whh,
                         preferred_element_type=jnp.float32) + bhh
            r = jax.nn.sigmoid(gx[:, :H] + gh[:, :H])
            z = jax.nn.sigmoid(gx[:, H:2 * H] + gh[:, H:2 * H])
            n = jnp.tanh(gx[:, 2 * H:] + r * gh[:, 2 * H:])
            h_new = (1.0 - z) * n + z * h
            valid = t < lens                      # (B, 1) bool
            # pad_packed_sequence -> padded positions are exactly 0
            out_ref[lt] = jnp.where(valid, h_new, 0.0)
            # packed-sequence semantics: hidden only advances on valid timesteps
            return jnp.where(valid, h_new, h)

        h_ref[...] = lax.fori_loop(0, TB, body, h_ref[...], unroll=unroll)

    return kernel


def _bidir_gru_layer(x, wih, whh, bih, bhh, lens_b1):
    # x: (T, B, Din) f32 time-major; wih: (2, Din, 3H); whh: (2, H, 3H);
    # bih/bhh: (2, 3H); lens_b1: (B, 1) int32. Returns (T, B, 2H) f32.
    T, B, Din = x.shape
    H = whh.shape[1]

    # Hoisted input projection: one big matmul for BOTH directions (bf16 MXU, f32 acc).
    gx = jnp.einsum("tbd,edh->etbh", x.astype(jnp.bfloat16),
                    wih.astype(jnp.bfloat16),
                    preferred_element_type=jnp.float32)
    gx = gx + bih[:, None, None, :]                                 # (2, T, B, 3H)

    # Time tiling: keep each gx block around <= 4 MiB so the kernel scales to long T
    # (double-buffered blocks fit the 16/32 MiB default scoped VMEM on v5e/v7x).
    TB = max(1, min(T, (4 * 1024 * 1024) // max(1, B * 3 * H * 4)))
    n_tb = pl.cdiv(T, TB)
    unroll = True if TB <= 32 else 8

    kernel = _make_bidir_gru_kernel(TB, n_tb, B, H, unroll)

    def _tb_idx(d, k):                          # bwd direction walks time blocks reversed
        return jnp.where(d == 0, k, n_tb - 1 - k)

    grid_spec = pltpu.PrefetchScalarGridSpec(
        num_scalar_prefetch=0,
        grid=(2, n_tb),
        in_specs=[
            pl.BlockSpec((B, 1), lambda d, k: (0, 0)),                        # lens
            pl.BlockSpec((None, TB, B, 3 * H),
                         lambda d, k: (d, _tb_idx(d, k), 0, 0)),              # gx
            pl.BlockSpec((None, H, 3 * H), lambda d, k: (d, 0, 0)),           # W_hh
            pl.BlockSpec((None, 1, 3 * H), lambda d, k: (d, 0, 0)),           # b_hh
        ],
        out_specs=pl.BlockSpec((TB, B, H),
                               lambda d, k: (_tb_idx(d, k), 0, d)),           # fused out
        scratch_shapes=[pltpu.VMEM((B, H), jnp.float32)],                     # h carry
    )

    cost = pl.CostEstimate(
        flops=int(2 * 2 * T * B * H * 3 * H),                 # h @ W_hh, both directions
        transcendentals=int(2 * T * B * 3 * H),               # sigmoid/sigmoid/tanh
        bytes_accessed=int(2 * T * B * 3 * H * 4 + T * B * 2 * H * 4
                           + 2 * H * 3 * H * 2 + 2 * 3 * H * 4 + B * 4),
    )

    return pl.pallas_call(
        kernel,
        grid_spec=grid_spec,
        out_shape=jax.ShapeDtypeStruct((T, B, 2 * H), jnp.float32),
        compiler_params=pltpu.CompilerParams(
            dimension_semantics=("parallel", "arbitrary"),     # dirs -> 2 TCs on v7x
            vmem_limit_bytes=32 * 1024 * 1024,
        ),
        cost_estimate=cost,
    )(lens_b1, gx, whh.astype(jnp.bfloat16), bhh[:, None, :])


# ----------------------------------------------------------------------------
# Parameter construction (deterministic, PyTorch-style uniform(-1/sqrt(H), 1/sqrt(H)))
# ----------------------------------------------------------------------------
def init_encoder_params(key, n_src_vocab, d_word_vec, d_model, n_layers):
    params = {}
    key, k_emb = jax.random.split(key)
    emb = jax.random.normal(k_emb, (n_src_vocab, d_word_vec), jnp.float32) * 0.1
    emb = emb.at[0].set(0.0)          # padding_idx = Constants.PAD = 0
    params["emb"] = emb

    bound = 1.0 / math.sqrt(d_model)
    layers = []
    for layer in range(n_layers):
        d_in = d_word_vec if layer == 0 else 2 * d_model
        key, k1, k2, k3, k4 = jax.random.split(key, 5)
        layers.append(dict(
            wih=jax.random.uniform(k1, (2, d_in, 3 * d_model), jnp.float32, -bound, bound),
            whh=jax.random.uniform(k2, (2, d_model, 3 * d_model), jnp.float32, -bound, bound),
            bih=jax.random.uniform(k3, (2, 3 * d_model), jnp.float32, -bound, bound),
            bhh=jax.random.uniform(k4, (2, 3 * d_model), jnp.float32, -bound, bound),
        ))
    params["layers"] = layers
    return params


# ----------------------------------------------------------------------------
# Encoder forward (embedding / projection glue in XLA, recurrence in Pallas)
# ----------------------------------------------------------------------------
def encoder_forward(params, x_in, x_in_lens):
    # x_in: (B, T) int32 token ids (PAD=0); x_in_lens: (B,) int32 sorted descending.
    B, T = x_in.shape
    x_emb = jnp.take(params["emb"], x_in, axis=0)                   # (B, T, D)
    # self.drop(...): identity in eval mode.
    # TODO(synk): training-mode dropout (input + inter-layer GRU dropout) not applied.
    x = jnp.transpose(x_emb, (1, 0, 2)).astype(jnp.float32)         # (T, B, D)

    # Pad batch to a multiple of 8 for sublane-dense vregs / unmasked stores in the
    # kernel; padded rows get length 0 so they stay exactly zero and are sliced away.
    B_pad = max(8, ((B + 7) // 8) * 8)
    lens = x_in_lens.astype(jnp.int32)
    if B_pad != B:
        x = jnp.pad(x, ((0, 0), (0, B_pad - B), (0, 0)))
        lens = jnp.pad(lens, (0, B_pad - B))
    lens_b1 = lens.reshape(B_pad, 1)

    h = x
    for layer in params["layers"]:
        h = _bidir_gru_layer(h, layer["wih"], layer["whh"],
                             layer["bih"], layer["bhh"], lens_b1)   # (T, B_pad, 2H)

    out = jnp.transpose(h, (1, 0, 2))                               # (B_pad, T, 2H)
    return out[:B]


# ----------------------------------------------------------------------------
if __name__ == "__main__":
    n_src_vocab = 16
    d_word_vec = 128
    d_model = 128
    n_layers = 2
    batch = 2
    seq_len = 8

    key = jax.random.PRNGKey(0)
    params = init_encoder_params(key, n_src_vocab, d_word_vec, d_model, n_layers)

    # Lengths sorted descending (pack_padded_sequence requirement); pad with PAD=0.
    lengths = jnp.array([8, 5], dtype=jnp.int32)
    k_tok = jax.random.PRNGKey(1)
    tokens = jax.random.randint(k_tok, (batch, seq_len), 1, n_src_vocab, dtype=jnp.int32)
    pad_mask = jnp.arange(seq_len)[None, :] < lengths[:, None]
    x_in = jnp.where(pad_mask, tokens, 0)

    fwd_fn = jax.jit(encoder_forward)
    out = jax.block_until_ready(fwd_fn(params, x_in, lengths))

    assert out.shape == (batch, seq_len, 2 * d_model), out.shape
    # Padded positions must be exactly zero (pad_packed_sequence semantics).
    assert float(jnp.abs(out[1, 5:]).max()) == 0.0
    assert bool(jnp.all(jnp.isfinite(out)))

    print("KERNEL_OK")
</pallas_src>

<mosaic_0001>
module attributes {stable_mosaic.version = 11 : i64} {
  func.func @kernel(%arg0: i32, %arg1: i32, %arg2: memref<8x1xi32, #tpu.memory_space<vmem>>, %arg3: memref<1x8x8x384xf32, #tpu.memory_space<vmem>>, %arg4: memref<1x128x384xbf16, #tpu.memory_space<vmem>>, %arg5: memref<1x1x384xf32, #tpu.memory_space<vmem>>, %arg6: memref<8x8x128xf32, #tpu.memory_space<vmem>>, %arg7: memref<8x128xf32, #tpu.memory_space<vmem>>) attributes {dimension_semantics = [#tpu.dimension_semantics<parallel>, #tpu.dimension_semantics<arbitrary>], iteration_bounds = array<i64: 2, 1>, scalar_prefetch = 0 : i64, scratch_operands = 1 : i64, tpu.core_type = #tpu.core_type<tc>, window_params = [{pipeline_mode = #tpu.pipeline_mode<synchronous>, transform_indices = @transform_0, window_bounds = array<i64: 8, 1>}, {transform_indices = @transform_1, window_bounds = array<i64: 1, 8, 8, 384>}, {transform_indices = @transform_2, window_bounds = array<i64: 1, 128, 384>}, {transform_indices = @transform_3, window_bounds = array<i64: 1, 1, 384>}, {transform_indices = @transform_4, window_bounds = array<i64: 8, 8, 128>}]} {
    %c0_i32 = arith.constant 0 : i32
    %0 = arith.cmpi eq, %arg0, %c0_i32 : i32
    %c0_i32_0 = arith.constant 0 : i32
    %1 = arith.subi %c0_i32_0, %arg1 : i32
    %2 = arith.select %0, %arg1, %1 : i32
    %c8_i32 = arith.constant 8 : i32
    %3 = arith.muli %2, %c8_i32 : i32
    %c0_i32_1 = arith.constant 0 : i32
    %4 = arith.cmpi eq, %arg1, %c0_i32_1 : i32
    %5 = arith.extui %4 : i1 to i32
    %c0_i32_2 = arith.constant 0 : i32
    %6 = arith.cmpi ne, %5, %c0_i32_2 : i32
    scf.if %6 {
      %cst_103 = arith.constant 0.000000e+00 : f32
      %400 = vector.broadcast %cst_103 : f32 to vector<8x128xf32>
      %c0_104 = arith.constant 0 : index
      %c0_105 = arith.constant 0 : index
      %401 = vector.load %arg7[%c0_104, %c0_105] : memref<8x128xf32, #tpu.memory_space<vmem>>, vector<8x128xf32>
      tpu.vector_store %arg7[%c0_104, %c0_105], %400 {strides = array<i32>} : memref<8x128xf32, #tpu.memory_space<vmem>>, vector<8x128xf32>,
    } else {
    }
    %c0 = arith.constant 0 : index
    %c0_3 = arith.constant 0 : index
    %c0_4 = arith.constant 0 : index
    %7 = vector.load %arg4[%c0, %c0_3, %c0_4] : memref<1x128x384xbf16, #tpu.memory_space<vmem>>, vector<1x128x384xbf16>
    %8 = vector.shape_cast %7 : vector<1x128x384xbf16> to vector<128x384xbf16>
    %c0_5 = arith.constant 0 : index
    %c0_6 = arith.constant 0 : index
    %c0_7 = arith.constant 0 : index
    %9 = vector.load %arg5[%c0_5, %c0_6, %c0_7] : memref<1x1x384xf32, #tpu.memory_space<vmem>>, vector<1x1x384xf32>
    %10 = vector.shape_cast %9 : vector<1x1x384xf32> to vector<1x384xf32>
    %11 = vector.shape_cast %10 : vector<1x384xf32> to vector<1x384xf32>
    %12 = vector.broadcast %11 : vector<1x384xf32> to vector<8x384xf32>
    %c0_8 = arith.constant 0 : index
    %c0_9 = arith.constant 0 : index
    %13 = vector.load %arg2[%c0_8, %c0_9] : memref<8x1xi32, #tpu.memory_space<vmem>>, vector<8x1xi32>
    %c0_10 = arith.constant 0 : index
    %c0_11 = arith.constant 0 : index
    %14 = vector.load %arg7[%c0_10, %c0_11] : memref<8x128xf32, #tpu.memory_space<vmem>>, vector<8x128xf32>
    %c0_i32_12 = arith.constant 0 : i32
    %c7_i32 = arith.constant 7 : i32
    %15 = arith.subi %c7_i32, %c0_i32_12 : i32
    %16 = arith.select %0, %c0_i32_12, %15 : i32
    %17 = arith.addi %3, %16 : i32
    %c0_13 = arith.constant 0 : index
    %18 = arith.index_cast %16 : i32 to index
    %c0_14 = arith.constant 0 : index
    %c0_15 = arith.constant 0 : index
    %19 = vector.load %arg3[%c0_13, %18, %c0_14, %c0_15] : memref<1x8x8x384xf32, #tpu.memory_space<vmem>>, vector<1x1x8x384xf32>
    %20 = vector.shape_cast %19 : vector<1x1x8x384xf32> to vector<8x384xf32>
    %21 = arith.truncf %14 : vector<8x128xf32> to vector<8x128xbf16>
    %cst = arith.constant dense<0.000000e+00> : vector<8x384xf32>
    %22 = tpu.matmul %21, %8, %cst {dimension_numbers = #tpu.dot_dimension_numbers<[1], [0], [0], [1], [0, 0, 1, 1], [], []>} : vector<8x128xbf16>, vector<128x384xbf16>, vector<8x384xf32> -> vector<8x384xf32>
    %23 = arith.addf %22, %12 : vector<8x384xf32>
    %24 = vector.extract_strided_slice %20 {offsets = [0, 0], sizes = [8, 128], strides = [1, 1]} : vector<8x384xf32> to vector<8x128xf32>
    %25 = vector.extract_strided_slice %23 {offsets = [0, 0], sizes = [8, 128], strides = [1, 1]} : vector<8x384xf32> to vector<8x128xf32>
    %26 = arith.addf %24, %25 : vector<8x128xf32>
    %27 = arith.negf %26 : vector<8x128xf32>
    %28 = math.exp %27 : vector<8x128xf32>
    %cst_16 = arith.constant 1.000000e+00 : f32
    %29 = vector.broadcast %cst_16 : f32 to vector<8x128xf32>
    %30 = arith.addf %29, %28 : vector<8x128xf32>
    %31 = arith.divf %29, %30 : vector<8x128xf32>
    %32 = vector.extract_strided_slice %20 {offsets = [0, 128], sizes = [8, 128], strides = [1, 1]} : vector<8x384xf32> to vector<8x128xf32>
    %33 = vector.extract_strided_slice %23 {offsets = [0, 128], sizes = [8, 128], strides = [1, 1]} : vector<8x384xf32> to vector<8x128xf32>
    %34 = arith.addf %32, %33 : vector<8x128xf32>
    %35 = arith.negf %34 : vector<8x128xf32>
    %36 = math.exp %35 : vector<8x128xf32>
    %cst_17 = arith.constant 1.000000e+00 : f32
    %37 = vector.broadcast %cst_17 : f32 to vector<8x128xf32>
    %38 = arith.addf %37, %36 : vector<8x128xf32>
    %39 = arith.divf %37, %38 : vector<8x128xf32>
    %40 = vector.extract_strided_slice %20 {offsets = [0, 256], sizes = [8, 128], strides = [1, 1]} : vector<8x384xf32> to vector<8x128xf32>
    %41 = vector.extract_strided_slice %23 {offsets = [0, 256], sizes = [8, 128], strides = [1, 1]} : vector<8x384xf32> to vector<8x128xf32>
    %42 = arith.mulf %31, %41 : vector<8x128xf32>
    %43 = arith.addf %40, %42 : vector<8x128xf32>
    %44 = math.tanh %43 : vector<8x128xf32>
    %cst_18 = arith.constant 1.000000e+00 : f32
    %45 = vector.broadcast %cst_18 : f32 to vector<8x128xf32>
    %46 = arith.subf %45, %39 : vector<8x128xf32>
    %47 = arith.mulf %46, %44 : vector<8x128xf32>
    %48 = arith.mulf %39, %14 : vector<8x128xf32>
    %49 = arith.addf %47, %48 : vector<8x128xf32>
    %50 = vector.broadcast %17 : i32 to vector<8x1xi32>
    %51 = arith.cmpi slt, %50, %13 : vector<8x1xi32>
    %cst_19 = arith.constant 0.000000e+00 : f32
    %52 = vector.shape_cast %51 : vector<8x1xi1> to vector<8x1xi1>
    %53 = vector.broadcast %52 : vector<8x1xi1> to vector<8x128xi1>
    %54 = vector.broadcast %cst_19 : f32 to vector<8x128xf32>
    %55 = arith.select %53, %49, %54 : vector<8x128xi1>, vector<8x128xf32>
    %56 = arith.index_cast %16 : i32 to index
    %c0_20 = arith.constant 0 : index
    %c0_21 = arith.constant 0 : index
    %57 = vector.load %arg6[%56, %c0_20, %c0_21] : memref<8x8x128xf32, #tpu.memory_space<vmem>>, vector<1x8x128xf32>
    %58 = vector.shape_cast %57 : vector<1x8x128xf32> to vector<8x128xf32>
    %59 = vector.shape_cast %55 : vector<8x128xf32> to vector<1x8x128xf32>
    tpu.vector_store %arg6[%56, %c0_20, %c0_21], %59 {strides = array<i32>} : memref<8x8x128xf32, #tpu.memory_space<vmem>>, vector<1x8x128xf32>,
    %60 = vector.shape_cast %51 : vector<8x1xi1> to vector<8x1xi1>
    %61 = vector.broadcast %60 : vector<8x1xi1> to vector<8x128xi1>
    %62 = arith.select %61, %49, %14 : vector<8x128xi1>, vector<8x128xf32>
    %c1_i32 = arith.constant 1 : i32
    %c7_i32_22 = arith.constant 7 : i32
    %63 = arith.subi %c7_i32_22, %c1_i32 : i32
    %64 = arith.select %0, %c1_i32, %63 : i32
    %65 = arith.addi %3, %64 : i32
    %c0_23 = arith.constant 0 : index
    %66 = arith.index_cast %64 : i32 to index
    %c0_24 = arith.constant 0 : index
    %c0_25 = arith.constant 0 : index
    %67 = vector.load %arg3[%c0_23, %66, %c0_24, %c0_25] : memref<1x8x8x384xf32, #tpu.memory_space<vmem>>, vector<1x1x8x384xf32>
    %68 = vector.shape_cast %67 : vector<1x1x8x384xf32> to vector<8x384xf32>
    %69 = arith.truncf %62 : vector<8x128xf32> to vector<8x128xbf16>
    %cst_26 = arith.constant dense<0.000000e+00> : vector<8x384xf32>
    %70 = tpu.matmul %69, %8, %cst_26 {dimension_numbers = #tpu.dot_dimension_numbers<[1], [0], [0], [1], [0, 0, 1, 1], [], []>} : vector<8x128xbf16>, vector<128x384xbf16>, vector<8x384xf32> -> vector<8x384xf32>
    %71 = arith.addf %70, %12 : vector<8x384xf32>
    %72 = vector.extract_strided_slice %68 {offsets = [0, 0], sizes = [8, 128], strides = [1, 1]} : vector<8x384xf32> to vector<8x128xf32>
    %73 = vector.extract_strided_slice %71 {offsets = [0, 0], sizes = [8, 128], strides = [1, 1]} : vector<8x384xf32> to vector<8x128xf32>
    %74 = arith.addf %72, %73 : vector<8x128xf32>
    %75 = arith.negf %74 : vector<8x128xf32>
    %76 = math.exp %75 : vector<8x128xf32>
    %cst_27 = arith.constant 1.000000e+00 : f32
    %77 = vector.broadcast %cst_27 : f32 to vector<8x128xf32>
    %78 = arith.addf %77, %76 : vector<8x128xf32>
    %79 = arith.divf %77, %78 : vector<8x128xf32>
    %80 = vector.extract_strided_slice %68 {offsets = [0, 128], sizes = [8, 128], strides = [1, 1]} : vector<8x384xf32> to vector<8x128xf32>
    %81 = vector.extract_strided_slice %71 {offsets = [0, 128], sizes = [8, 128], strides = [1, 1]} : vector<8x384xf32> to vector<8x128xf32>
    %82 = arith.addf %80, %81 : vector<8x128xf32>
    %83 = arith.negf %82 : vector<8x128xf32>
    %84 = math.exp %83 : vector<8x128xf32>
    %cst_28 = arith.constant 1.000000e+00 : f32
    %85 = vector.broadcast %cst_28 : f32 to vector<8x128xf32>
    %86 = arith.addf %85, %84 : vector<8x128xf32>
    %87 = arith.divf %85, %86 : vector<8x128xf32>
    %88 = vector.extract_strided_slice %68 {offsets = [0, 256], sizes = [8, 128], strides = [1, 1]} : vector<8x384xf32> to vector<8x128xf32>
    %89 = vector.extract_strided_slice %71 {offsets = [0, 256], sizes = [8, 128], strides = [1, 1]} : vector<8x384xf32> to vector<8x128xf32>
    %90 = arith.mulf %79, %89 : vector<8x128xf32>
    %91 = arith.addf %88, %90 : vector<8x128xf32>
    %92 = math.tanh %91 : vector<8x128xf32>
    %cst_29 = arith.constant 1.000000e+00 : f32
    %93 = vector.broadcast %cst_29 : f32 to vector<8x128xf32>
    %94 = arith.subf %93, %87 : vector<8x128xf32>
    %95 = arith.mulf %94, %92 : vector<8x128xf32>
    %96 = arith.mulf %87, %62 : vector<8x128xf32>
    %97 = arith.addf %95, %96 : vector<8x128xf32>
    %98 = vector.broadcast %65 : i32 to vector<8x1xi32>
    %99 = arith.cmpi slt, %98, %13 : vector<8x1xi32>
    %cst_30 = arith.constant 0.000000e+00 : f32
    %100 = vector.shape_cast %99 : vector<8x1xi1> to vector<8x1xi1>
    %101 = vector.broadcast %100 : vector<8x1xi1> to vector<8x128xi1>
    %102 = vector.broadcast %cst_30 : f32 to vector<8x128xf32>
    %103 = arith.select %101, %97, %102 : vector<8x128xi1>, vector<8x128xf32>
    %104 = arith.index_cast %64 : i32 to index
    %c0_31 = arith.constant 0 : index
    %c0_32 = arith.constant 0 : index
    %105 = vector.load %arg6[%104, %c0_31, %c0_32] : memref<8x8x128xf32, #tpu.memory_space<vmem>>, vector<1x8x128xf32>
    %106 = vector.shape_cast %105 : vector<1x8x128xf32> to vector<8x128xf32>
    %107 = vector.shape_cast %103 : vector<8x128xf32> to vector<1x8x128xf32>
    tpu.vector_store %arg6[%104, %c0_31, %c0_32], %107 {strides = array<i32>} : memref<8x8x128xf32, #tpu.memory_space<vmem>>, vector<1x8x128xf32>,
    %108 = vector.shape_cast %99 : vector<8x1xi1> to vector<8x1xi1>
    %109 = vector.broadcast %108 : vector<8x1xi1> to vector<8x128xi1>
    %110 = arith.select %109, %97, %62 : vector<8x128xi1>, vector<8x128xf32>
    %c2_i32 = arith.constant 2 : i32
    %c7_i32_33 = arith.constant 7 : i32
    %111 = arith.subi %c7_i32_33, %c2_i32 : i32
    %112 = arith.select %0, %c2_i32, %111 : i32
    %113 = arith.addi %3, %112 : i32
    %c0_34 = arith.constant 0 : index
    %114 = arith.index_cast %112 : i32 to index
    %c0_35 = arith.constant 0 : index
    %c0_36 = arith.constant 0 : index
    %115 = vector.load %arg3[%c0_34, %114, %c0_35, %c0_36] : memref<1x8x8x384xf32, #tpu.memory_space<vmem>>, vector<1x1x8x384xf32>
    %116 = vector.shape_cast %115 : vector<1x1x8x384xf32> to vector<8x384xf32>
    %117 = arith.truncf %110 : vector<8x128xf32> to vector<8x128xbf16>
    %cst_37 = arith.constant dense<0.000000e+00> : vector<8x384xf32>
    %118 = tpu.matmul %117, %8, %cst_37 {dimension_numbers = #tpu.dot_dimension_numbers<[1], [0], [0], [1], [0, 0, 1, 1], [], []>} : vector<8x128xbf16>, vector<128x384xbf16>, vector<8x384xf32> -> vector<8x384xf32>
    %119 = arith.addf %118, %12 : vector<8x384xf32>
    %120 = vector.extract_strided_slice %116 {offsets = [0, 0], sizes = [8, 128], strides = [1, 1]} : vector<8x384xf32> to vector<8x128xf32>
    %121 = vector.extract_strided_slice %119 {offsets = [0, 0], sizes = [8, 128], strides = [1, 1]} : vector<8x384xf32> to vector<8x128xf32>
    %122 = arith.addf %120, %121 : vector<8x128xf32>
    %123 = arith.negf %122 : vector<8x128xf32>
    %124 = math.exp %123 : vector<8x128xf32>
    %cst_38 = arith.constant 1.000000e+00 : f32
    %125 = vector.broadcast %cst_38 : f32 to vector<8x128xf32>
    %126 = arith.addf %125, %124 : vector<8x128xf32>
    %127 = arith.divf %125, %126 : vector<8x128xf32>
    %128 = vector.extract_strided_slice %116 {offsets = [0, 128], sizes = [8, 128], strides = [1, 1]} : vector<8x384xf32> to vector<8x128xf32>
    %129 = vector.extract_strided_slice %119 {offsets = [0, 128], sizes = [8, 128], strides = [1, 1]} : vector<8x384xf32> to vector<8x128xf32>
    %130 = arith.addf %128, %129 : vector<8x128xf32>
    %131 = arith.negf %130 : vector<8x128xf32>
    %132 = math.exp %131 : vector<8x128xf32>
    %cst_39 = arith.constant 1.000000e+00 : f32
    %133 = vector.broadcast %cst_39 : f32 to vector<8x128xf32>
    %134 = arith.addf %133, %132 : vector<8x128xf32>
    %135 = arith.divf %133, %134 : vector<8x128xf32>
    %136 = vector.extract_strided_slice %116 {offsets = [0, 256], sizes = [8, 128], strides = [1, 1]} : vector<8x384xf32> to vector<8x128xf32>
    %137 = vector.extract_strided_slice %119 {offsets = [0, 256], sizes = [8, 128], strides = [1, 1]} : vector<8x384xf32> to vector<8x128xf32>
    %138 = arith.mulf %127, %137 : vector<8x128xf32>
    %139 = arith.addf %136, %138 : vector<8x128xf32>
    %140 = math.tanh %139 : vector<8x128xf32>
    %cst_40 = arith.constant 1.000000e+00 : f32
    %141 = vector.broadcast %cst_40 : f32 to vector<8x128xf32>
    %142 = arith.subf %141, %135 : vector<8x128xf32>
    %143 = arith.mulf %142, %140 : vector<8x128xf32>
    %144 = arith.mulf %135, %110 : vector<8x128xf32>
    %145 = arith.addf %143, %144 : vector<8x128xf32>
    %146 = vector.broadcast %113 : i32 to vector<8x1xi32>
    %147 = arith.cmpi slt, %146, %13 : vector<8x1xi32>
    %cst_41 = arith.constant 0.000000e+00 : f32
    %148 = vector.shape_cast %147 : vector<8x1xi1> to vector<8x1xi1>
    %149 = vector.broadcast %148 : vector<8x1xi1> to vector<8x128xi1>
    %150 = vector.broadcast %cst_41 : f32 to vector<8x128xf32>
    %151 = arith.select %149, %145, %150 : vector<8x128xi1>, vector<8x128xf32>
    %152 = arith.index_cast %112 : i32 to index
    %c0_42 = arith.constant 0 : index
    %c0_43 = arith.constant 0 : index
    %153 = vector.load %arg6[%152, %c0_42, %c0_43] : memref<8x8x128xf32, #tpu.memory_space<vmem>>, vector<1x8x128xf32>
    %154 = vector.shape_cast %153 : vector<1x8x128xf32> to vector<8x128xf32>
    %155 = vector.shape_cast %151 : vector<8x128xf32> to vector<1x8x128xf32>
    tpu.vector_store %arg6[%152, %c0_42, %c0_43], %155 {strides = array<i32>} : memref<8x8x128xf32, #tpu.memory_space<vmem>>, vector<1x8x128xf32>,
    %156 = vector.shape_cast %147 : vector<8x1xi1> to vector<8x1xi1>
    %157 = vector.broadcast %156 : vector<8x1xi1> to vector<8x128xi1>
    %158 = arith.select %157, %145, %110 : vector<8x128xi1>, vector<8x128xf32>
    %c3_i32 = arith.constant 3 : i32
    %c7_i32_44 = arith.constant 7 : i32
    %159 = arith.subi %c7_i32_44, %c3_i32 : i32
    %160 = arith.select %0, %c3_i32, %159 : i32
    %161 = arith.addi %3, %160 : i32
    %c0_45 = arith.constant 0 : index
    %162 = arith.index_cast %160 : i32 to index
    %c0_46 = arith.constant 0 : index
    %c0_47 = arith.constant 0 : index
    %163 = vector.load %arg3[%c0_45, %162, %c0_46, %c0_47] : memref<1x8x8x384xf32, #tpu.memory_space<vmem>>, vector<1x1x8x384xf32>
    %164 = vector.shape_cast %163 : vector<1x1x8x384xf32> to vector<8x384xf32>
    %165 = arith.truncf %158 : vector<8x128xf32> to vector<8x128xbf16>
    %cst_48 = arith.constant dense<0.000000e+00> : vector<8x384xf32>
    %166 = tpu.matmul %165, %8, %cst_48 {dimension_numbers = #tpu.dot_dimension_numbers<[1], [0], [0], [1], [0, 0, 1, 1], [], []>} : vector<8x128xbf16>, vector<128x384xbf16>, vector<8x384xf32> -> vector<8x384xf32>
    %167 = arith.addf %166, %12 : vector<8x384xf32>
    %168 = vector.extract_strided_slice %164 {offsets = [0, 0], sizes = [8, 128], strides = [1, 1]} : vector<8x384xf32> to vector<8x128xf32>
    %169 = vector.extract_strided_slice %167 {offsets = [0, 0], sizes = [8, 128], strides = [1, 1]} : vector<8x384xf32> to vector<8x128xf32>
    %170 = arith.addf %168, %169 : vector<8x128xf32>
    %171 = arith.negf %170 : vector<8x128xf32>
    %172 = math.exp %171 : vector<8x128xf32>
    %cst_49 = arith.constant 1.000000e+00 : f32
    %173 = vector.broadcast %cst_49 : f32 to vector<8x128xf32>
    %174 = arith.addf %173, %172 : vector<8x128xf32>
    %175 = arith.divf %173, %174 : vector<8x128xf32>
    %176 = vector.extract_strided_slice %164 {offsets = [0, 128], sizes = [8, 128], strides = [1, 1]} : vector<8x384xf32> to vector<8x128xf32>
    %177 = vector.extract_strided_slice %167 {offsets = [0, 128], sizes = [8, 128], strides = [1, 1]} : vector<8x384xf32> to vector<8x128xf32>
    %178 = arith.addf %176, %177 : vector<8x128xf32>
    %179 = arith.negf %178 : vector<8x128xf32>
    %180 = math.exp %179 : vector<8x128xf32>
    %cst_50 = arith.constant 1.000000e+00 : f32
    %181 = vector.broadcast %cst_50 : f32 to vector<8x128xf32>
    %182 = arith.addf %181, %180 : vector<8x128xf32>
    %183 = arith.divf %181, %182 : vector<8x128xf32>
    %184 = vector.extract_strided_slice %164 {offsets = [0, 256], sizes = [8, 128], strides = [1, 1]} : vector<8x384xf32> to vector<8x128xf32>
    %185 = vector.extract_strided_slice %167 {offsets = [0, 256], sizes = [8, 128], strides = [1, 1]} : vector<8x384xf32> to vector<8x128xf32>
    %186 = arith.mulf %175, %185 : vector<8x128xf32>
    %187 = arith.addf %184, %186 : vector<8x128xf32>
    %188 = math.tanh %187 : vector<8x128xf32>
    %cst_51 = arith.constant 1.000000e+00 : f32
    %189 = vector.broadcast %cst_51 : f32 to vector<8x128xf32>
    %190 = arith.subf %189, %183 : vector<8x128xf32>
    %191 = arith.mulf %190, %188 : vector<8x128xf32>
    %192 = arith.mulf %183, %158 : vector<8x128xf32>
    %193 = arith.addf %191, %192 : vector<8x128xf32>
    %194 = vector.broadcast %161 : i32 to vector<8x1xi32>
    %195 = arith.cmpi slt, %194, %13 : vector<8x1xi32>
    %cst_52 = arith.constant 0.000000e+00 : f32
    %196 = vector.shape_cast %195 : vector<8x1xi1> to vector<8x1xi1>
    %197 = vector.broadcast %196 : vector<8x1xi1> to vector<8x128xi1>
    %198 = vector.broadcast %cst_52 : f32 to vector<8x128xf32>
    %199 = arith.select %197, %193, %198 : vector<8x128xi1>, vector<8x128xf32>
    %200 = arith.index_cast %160 : i32 to index
    %c0_53 = arith.constant 0 : index
    %c0_54 = arith.constant 0 : index
    %201 = vector.load %arg6[%200, %c0_53, %c0_54] : memref<8x8x128xf32, #tpu.memory_space<vmem>>, vector<1x8x128xf32>
    %202 = vector.shape_cast %201 : vector<1x8x128xf32> to vector<8x128xf32>
    %203 = vector.shape_cast %199 : vector<8x128xf32> to vector<1x8x128xf32>
    tpu.vector_store %arg6[%200, %c0_53, %c0_54], %203 {strides = array<i32>} : memref<8x8x128xf32, #tpu.memory_space<vmem>>, vector<1x8x128xf32>,
    %204 = vector.shape_cast %195 : vector<8x1xi1> to vector<8x1xi1>
    %205 = vector.broadcast %204 : vector<8x1xi1> to vector<8x128xi1>
    %206 = arith.select %205, %193, %158 : vector<8x128xi1>, vector<8x128xf32>
    %c4_i32 = arith.constant 4 : i32
    %c7_i32_55 = arith.constant 7 : i32
    %207 = arith.subi %c7_i32_55, %c4_i32 : i32
    %208 = arith.select %0, %c4_i32, %207 : i32
    %209 = arith.addi %3, %208 : i32
    %c0_56 = arith.constant 0 : index
    %210 = arith.index_cast %208 : i32 to index
    %c0_57 = arith.constant 0 : index
    %c0_58 = arith.constant 0 : index
    %211 = vector.load %arg3[%c0_56, %210, %c0_57, %c0_58] : memref<1x8x8x384xf32, #tpu.memory_space<vmem>>, vector<1x1x8x384xf32>
    %212 = vector.shape_cast %211 : vector<1x1x8x384xf32> to vector<8x384xf32>
    %213 = arith.truncf %206 : vector<8x128xf32> to vector<8x128xbf16>
    %cst_59 = arith.constant dense<0.000000e+00> : vector<8x384xf32>
    %214 = tpu.matmul %213, %8, %cst_59 {dimension_numbers = #tpu.dot_dimension_numbers<[1], [0], [0], [1], [0, 0, 1, 1], [], []>} : vector<8x128xbf16>, vector<128x384xbf16>, vector<8x384xf32> -> vector<8x384xf32>
    %215 = arith.addf %214, %12 : vector<8x384xf32>
    %216 = vector.extract_strided_slice %212 {offsets = [0, 0], sizes = [8, 128], strides = [1, 1]} : vector<8x384xf32> to vector<8x128xf32>
    %217 = vector.extract_strided_slice %215 {offsets = [0, 0], sizes = [8, 128], strides = [1, 1]} : vector<8x384xf32> to vector<8x128xf32>
    %218 = arith.addf %216, %217 : vector<8x128xf32>
    %219 = arith.negf %218 : vector<8x128xf32>
    %220 = math.exp %219 : vector<8x128xf32>
    %cst_60 = arith.constant 1.000000e+00 : f32
    %221 = vector.broadcast %cst_60 : f32 to vector<8x128xf32>
    %222 = arith.addf %221, %220 : vector<8x128xf32>
    %223 = arith.divf %221, %222 : vector<8x128xf32>
    %224 = vector.extract_strided_slice %212 {offsets = [0, 128], sizes = [8, 128], strides = [1, 1]} : vector<8x384xf32> to vector<8x128xf32>
    %225 = vector.extract_strided_slice %215 {offsets = [0, 128], sizes = [8, 128], strides = [1, 1]} : vector<8x384xf32> to vector<8x128xf32>
    %226 = arith.addf %224, %225 : vector<8x128xf32>
    %227 = arith.negf %226 : vector<8x128xf32>
    %228 = math.exp %227 : vector<8x128xf32>
    %cst_61 = arith.constant 1.000000e+00 : f32
    %229 = vector.broadcast %cst_61 : f32 to vector<8x128xf32>
    %230 = arith.addf %229, %228 : vector<8x128xf32>
    %231 = arith.divf %229, %230 : vector<8x128xf32>
    %232 = vector.extract_strided_slice %212 {offsets = [0, 256], sizes = [8, 128], strides = [1, 1]} : vector<8x384xf32> to vector<8x128xf32>
    %233 = vector.extract_strided_slice %215 {offsets = [0, 256], sizes = [8, 128], strides = [1, 1]} : vector<8x384xf32> to vector<8x128xf32>
    %234 = arith.mulf %223, %233 : vector<8x128xf32>
    %235 = arith.addf %232, %234 : vector<8x128xf32>
    %236 = math.tanh %235 : vector<8x128xf32>
    %cst_62 = arith.constant 1.000000e+00 : f32
    %237 = vector.broadcast %cst_62 : f32 to vector<8x128xf32>
    %238 = arith.subf %237, %231 : vector<8x128xf32>
    %239 = arith.mulf %238, %236 : vector<8x128xf32>
    %240 = arith.mulf %231, %206 : vector<8x128xf32>
    %241 = arith.addf %239, %240 : vector<8x128xf32>
    %242 = vector.broadcast %209 : i32 to vector<8x1xi32>
    %243 = arith.cmpi slt, %242, %13 : vector<8x1xi32>
    %cst_63 = arith.constant 0.000000e+00 : f32
    %244 = vector.shape_cast %243 : vector<8x1xi1> to vector<8x1xi1>
    %245 = vector.broadcast %244 : vector<8x1xi1> to vector<8x128xi1>
    %246 = vector.broadcast %cst_63 : f32 to vector<8x128xf32>
    %247 = arith.select %245, %241, %246 : vector<8x128xi1>, vector<8x128xf32>
    %248 = arith.index_cast %208 : i32 to index
    %c0_64 = arith.constant 0 : index
    %c0_65 = arith.constant 0 : index
    %249 = vector.load %arg6[%248, %c0_64, %c0_65] : memref<8x8x128xf32, #tpu.memory_space<vmem>>, vector<1x8x128xf32>
    %250 = vector.shape_cast %249 : vector<1x8x128xf32> to vector<8x128xf32>
    %251 = vector.shape_cast %247 : vector<8x128xf32> to vector<1x8x128xf32>
    tpu.vector_store %arg6[%248, %c0_64, %c0_65], %251 {strides = array<i32>} : memref<8x8x128xf32, #tpu.memory_space<vmem>>, vector<1x8x128xf32>,
    %252 = vector.shape_cast %243 : vector<8x1xi1> to vector<8x1xi1>
    %253 = vector.broadcast %252 : vector<8x1xi1> to vector<8x128xi1>
    %254 = arith.select %253, %241, %206 : vector<8x128xi1>, vector<8x128xf32>
    %c5_i32 = arith.constant 5 : i32
    %c7_i32_66 = arith.constant 7 : i32
    %255 = arith.subi %c7_i32_66, %c5_i32 : i32
    %256 = arith.select %0, %c5_i32, %255 : i32
    %257 = arith.addi %3, %256 : i32
    %c0_67 = arith.constant 0 : index
    %258 = arith.index_cast %256 : i32 to index
    %c0_68 = arith.constant 0 : index
    %c0_69 = arith.constant 0 : index
    %259 = vector.load %arg3[%c0_67, %258, %c0_68, %c0_69] : memref<1x8x8x384xf32, #tpu.memory_space<vmem>>, vector<1x1x8x384xf32>
    %260 = vector.shape_cast %259 : vector<1x1x8x384xf32> to vector<8x384xf32>
    %261 = arith.truncf %254 : vector<8x128xf32> to vector<8x128xbf16>
    %cst_70 = arith.constant dense<0.000000e+00> : vector<8x384xf32>
    %262 = tpu.matmul %261, %8, %cst_70 {dimension_numbers = #tpu.dot_dimension_numbers<[1], [0], [0], [1], [0, 0, 1, 1], [], []>} : vector<8x128xbf16>, vector<128x384xbf16>, vector<8x384xf32> -> vector<8x384xf32>
    %263 = arith.addf %262, %12 : vector<8x384xf32>
    %264 = vector.extract_strided_slice %260 {offsets = [0, 0], sizes = [8, 128], strides = [1, 1]} : vector<8x384xf32> to vector<8x128xf32>
    %265 = vector.extract_strided_slice %263 {offsets = [0, 0], sizes = [8, 128], strides = [1, 1]} : vector<8x384xf32> to vector<8x128xf32>
    %266 = arith.addf %264, %265 : vector<8x128xf32>
    %267 = arith.negf %266 : vector<8x128xf32>
    %268 = math.exp %267 : vector<8x128xf32>
    %cst_71 = arith.constant 1.000000e+00 : f32
    %269 = vector.broadcast %cst_71 : f32 to vector<8x128xf32>
    %270 = arith.addf %269, %268 : vector<8x128xf32>
    %271 = arith.divf %269, %270 : vector<8x128xf32>
    %272 = vector.extract_strided_slice %260 {offsets = [0, 128], sizes = [8, 128], strides = [1, 1]} : vector<8x384xf32> to vector<8x128xf32>
    %273 = vector.extract_strided_slice %263 {offsets = [0, 128], sizes = [8, 128], strides = [1, 1]} : vector<8x384xf32> to vector<8x128xf32>
    %274 = arith.addf %272, %273 : vector<8x128xf32>
    %275 = arith.negf %274 : vector<8x128xf32>
    %276 = math.exp %275 : vector<8x128xf32>
    %cst_72 = arith.constant 1.000000e+00 : f32
    %277 = vector.broadcast %cst_72 : f32 to vector<8x128xf32>
    %278 = arith.addf %277, %276 : vector<8x128xf32>
    %279 = arith.divf %277, %278 : vector<8x128xf32>
    %280 = vector.extract_strided_slice %260 {offsets = [0, 256], sizes = [8, 128], strides = [1, 1]} : vector<8x384xf32> to vector<8x128xf32>
    %281 = vector.extract_strided_slice %263 {offsets = [0, 256], sizes = [8, 128], strides = [1, 1]} : vector<8x384xf32> to vector<8x128xf32>
    %282 = arith.mulf %271, %281 : vector<8x128xf32>
    %283 = arith.addf %280, %282 : vector<8x128xf32>
    %284 = math.tanh %283 : vector<8x128xf32>
    %cst_73 = arith.constant 1.000000e+00 : f32
    %285 = vector.broadcast %cst_73 : f32 to vector<8x128xf32>
    %286 = arith.subf %285, %279 : vector<8x128xf32>
    %287 = arith.mulf %286, %284 : vector<8x128xf32>
    %288 = arith.mulf %279, %254 : vector<8x128xf32>
    %289 = arith.addf %287, %288 : vector<8x128xf32>
    %290 = vector.broadcast %257 : i32 to vector<8x1xi32>
    %291 = arith.cmpi slt, %290, %13 : vector<8x1xi32>
    %cst_74 = arith.constant 0.000000e+00 : f32
    %292 = vector.shape_cast %291 : vector<8x1xi1> to vector<8x1xi1>
    %293 = vector.broadcast %292 : vector<8x1xi1> to vector<8x128xi1>
    %294 = vector.broadcast %cst_74 : f32 to vector<8x128xf32>
    %295 = arith.select %293, %289, %294 : vector<8x128xi1>, vector<8x128xf32>
    %296 = arith.index_cast %256 : i32 to index
    %c0_75 = arith.constant 0 : index
    %c0_76 = arith.constant 0 : index
    %297 = vector.load %arg6[%296, %c0_75, %c0_76] : memref<8x8x128xf32, #tpu.memory_space<vmem>>, vector<1x8x128xf32>
    %298 = vector.shape_cast %297 : vector<1x8x128xf32> to vector<8x128xf32>
    %299 = vector.shape_cast %295 : vector<8x128xf32> to vector<1x8x128xf32>
    tpu.vector_store %arg6[%296, %c0_75, %c0_76], %299 {strides = array<i32>} : memref<8x8x128xf32, #tpu.memory_space<vmem>>, vector<1x8x128xf32>,
    %300 = vector.shape_cast %291 : vector<8x1xi1> to vector<8x1xi1>
    %301 = vector.broadcast %300 : vector<8x1xi1> to vector<8x128xi1>
    %302 = arith.select %301, %289, %254 : vector<8x128xi1>, vector<8x128xf32>
    %c6_i32 = arith.constant 6 : i32
    %c7_i32_77 = arith.constant 7 : i32
    %303 = arith.subi %c7_i32_77, %c6_i32 : i32
    %304 = arith.select %0, %c6_i32, %303 : i32
    %305 = arith.addi %3, %304 : i32
    %c0_78 = arith.constant 0 : index
    %306 = arith.index_cast %304 : i32 to index
    %c0_79 = arith.constant 0 : index
    %c0_80 = arith.constant 0 : index
    %307 = vector.load %arg3[%c0_78, %306, %c0_79, %c0_80] : memref<1x8x8x384xf32, #tpu.memory_space<vmem>>, vector<1x1x8x384xf32>
    %308 = vector.shape_cast %307 : vector<1x1x8x384xf32> to vector<8x384xf32>
    %309 = arith.truncf %302 : vector<8x128xf32> to vector<8x128xbf16>
    %cst_81 = arith.constant dense<0.000000e+00> : vector<8x384xf32>
    %310 = tpu.matmul %309, %8, %cst_81 {dimension_numbers = #tpu.dot_dimension_numbers<[1], [0], [0], [1], [0, 0, 1, 1], [], []>} : vector<8x128xbf16>, vector<128x384xbf16>, vector<8x384xf32> -> vector<8x384xf32>
    %311 = arith.addf %310, %12 : vector<8x384xf32>
    %312 = vector.extract_strided_slice %308 {offsets = [0, 0], sizes = [8, 128], strides = [1, 1]} : vector<8x384xf32> to vector<8x128xf32>
    %313 = vector.extract_strided_slice %311 {offsets = [0, 0], sizes = [8, 128], strides = [1, 1]} : vector<8x384xf32> to vector<8x128xf32>
    %314 = arith.addf %312, %313 : vector<8x128xf32>
    %315 = arith.negf %314 : vector<8x128xf32>
    %316 = math.exp %315 : vector<8x128xf32>
    %cst_82 = arith.constant 1.000000e+00 : f32
    %317 = vector.broadcast %cst_82 : f32 to vector<8x128xf32>
    %318 = arith.addf %317, %316 : vector<8x128xf32>
    %319 = arith.divf %317, %318 : vector<8x128xf32>
    %320 = vector.extract_strided_slice %308 {offsets = [0, 128], sizes = [8, 128], strides = [1, 1]} : vector<8x384xf32> to vector<8x128xf32>
    %321 = vector.extract_strided_slice %311 {offsets = [0, 128], sizes = [8, 128], strides = [1, 1]} : vector<8x384xf32> to vector<8x128xf32>
    %322 = arith.addf %320, %321 : vector<8x128xf32>
    %323 = arith.negf %322 : vector<8x128xf32>
    %324 = math.exp %323 : vector<8x128xf32>
    %cst_83 = arith.constant 1.000000e+00 : f32
    %325 = vector.broadcast %cst_83 : f32 to vector<8x128xf32>
    %326 = arith.addf %325, %324 : vector<8x128xf32>
    %327 = arith.divf %325, %326 : vector<8x128xf32>
    %328 = vector.extract_strided_slice %308 {offsets = [0, 256], sizes = [8, 128], strides = [1, 1]} : vector<8x384xf32> to vector<8x128xf32>
    %329 = vector.extract_strided_slice %311 {offsets = [0, 256], sizes = [8, 128], strides = [1, 1]} : vector<8x384xf32> to vector<8x128xf32>
    %330 = arith.mulf %319, %329 : vector<8x128xf32>
    %331 = arith.addf %328, %330 : vector<8x128xf32>
    %332 = math.tanh %331 : vector<8x128xf32>
    %cst_84 = arith.constant 1.000000e+00 : f32
    %333 = vector.broadcast %cst_84 : f32 to vector<8x128xf32>
    %334 = arith.subf %333, %327 : vector<8x128xf32>
    %335 = arith.mulf %334, %332 : vector<8x128xf32>
    %336 = arith.mulf %327, %302 : vector<8x128xf32>
    %337 = arith.addf %335, %336 : vector<8x128xf32>
    %338 = vector.broadcast %305 : i32 to vector<8x1xi32>
    %339 = arith.cmpi slt, %338, %13 : vector<8x1xi32>
    %cst_85 = arith.constant 0.000000e+00 : f32
    %340 = vector.shape_cast %339 : vector<8x1xi1> to vector<8x1xi1>
    %341 = vector.broadcast %340 : vector<8x1xi1> to vector<8x128xi1>
    %342 = vector.broadcast %cst_85 : f32 to vector<8x128xf32>
    %343 = arith.select %341, %337, %342 : vector<8x128xi1>, vector<8x128xf32>
    %344 = arith.index_cast %304 : i32 to index
    %c0_86 = arith.constant 0 : index
    %c0_87 = arith.constant 0 : index
    %345 = vector.load %arg6[%344, %c0_86, %c0_87] : memref<8x8x128xf32, #tpu.memory_space<vmem>>, vector<1x8x128xf32>
    %346 = vector.shape_cast %345 : vector<1x8x128xf32> to vector<8x128xf32>
    %347 = vector.shape_cast %343 : vector<8x128xf32> to vector<1x8x128xf32>
    tpu.vector_store %arg6[%344, %c0_86, %c0_87], %347 {strides = array<i32>} : memref<8x8x128xf32, #tpu.memory_space<vmem>>, vector<1x8x128xf32>,
    %348 = vector.shape_cast %339 : vector<8x1xi1> to vector<8x1xi1>
    %349 = vector.broadcast %348 : vector<8x1xi1> to vector<8x128xi1>
    %350 = arith.select %349, %337, %302 : vector<8x128xi1>, vector<8x128xf32>
    %c7_i32_88 = arith.constant 7 : i32
    %c7_i32_89 = arith.constant 7 : i32
    %351 = arith.subi %c7_i32_89, %c7_i32_88 : i32
    %352 = arith.select %0, %c7_i32_88, %351 : i32
    %353 = arith.addi %3, %352 : i32
    %c0_90 = arith.constant 0 : index
    %354 = arith.index_cast %352 : i32 to index
    %c0_91 = arith.constant 0 : index
    %c0_92 = arith.constant 0 : index
    %355 = vector.load %arg3[%c0_90, %354, %c0_91, %c0_92] : memref<1x8x8x384xf32, #tpu.memory_space<vmem>>, vector<1x1x8x384xf32>
    %356 = vector.shape_cast %355 : vector<1x1x8x384xf32> to vector<8x384xf32>
    %357 = arith.truncf %350 : vector<8x128xf32> to vector<8x128xbf16>
    %cst_93 = arith.constant dense<0.000000e+00> : vector<8x384xf32>
    %358 = tpu.matmul %357, %8, %cst_93 {dimension_numbers = #tpu.dot_dimension_numbers<[1], [0], [0], [1], [0, 0, 1, 1], [], []>} : vector<8x128xbf16>, vector<128x384xbf16>, vector<8x384xf32> -> vector<8x384xf32>
    %359 = arith.addf %358, %12 : vector<8x384xf32>
    %360 = vector.extract_strided_slice %356 {offsets = [0, 0], sizes = [8, 128], strides = [1, 1]} : vector<8x384xf32> to vector<8x128xf32>
    %361 = vector.extract_strided_slice %359 {offsets = [0, 0], sizes = [8, 128], strides = [1, 1]} : vector<8x384xf32> to vector<8x128xf32>
    %362 = arith.addf %360, %361 : vector<8x128xf32>
    %363 = arith.negf %362 : vector<8x128xf32>
    %364 = math.exp %363 : vector<8x128xf32>
    %cst_94 = arith.constant 1.000000e+00 : f32
    %365 = vector.broadcast %cst_94 : f32 to vector<8x128xf32>
    %366 = arith.addf %365, %364 : vector<8x128xf32>
    %367 = arith.divf %365, %366 : vector<8x128xf32>
    %368 = vector.extract_strided_slice %356 {offsets = [0, 128], sizes = [8, 128], strides = [1, 1]} : vector<8x384xf32> to vector<8x128xf32>
    %369 = vector.extract_strided_slice %359 {offsets = [0, 128], sizes = [8, 128], strides = [1, 1]} : vector<8x384xf32> to vector<8x128xf32>
    %370 = arith.addf %368, %369 : vector<8x128xf32>
    %371 = arith.negf %370 : vector<8x128xf32>
    %372 = math.exp %371 : vector<8x128xf32>
    %cst_95 = arith.constant 1.000000e+00 : f32
    %373 = vector.broadcast %cst_95 : f32 to vector<8x128xf32>
    %374 = arith.addf %373, %372 : vector<8x128xf32>
    %375 = arith.divf %373, %374 : vector<8x128xf32>
    %376 = vector.extract_strided_slice %356 {offsets = [0, 256], sizes = [8, 128], strides = [1, 1]} : vector<8x384xf32> to vector<8x128xf32>
    %377 = vector.extract_strided_slice %359 {offsets = [0, 256], sizes = [8, 128], strides = [1, 1]} : vector<8x384xf32> to vector<8x128xf32>
    %378 = arith.mulf %367, %377 : vector<8x128xf32>
    %379 = arith.addf %376, %378 : vector<8x128xf32>
    %380 = math.tanh %379 : vector<8x128xf32>
    %cst_96 = arith.constant 1.000000e+00 : f32
    %381 = vector.broadcast %cst_96 : f32 to vector<8x128xf32>
    %382 = arith.subf %381, %375 : vector<8x128xf32>
    %383 = arith.mulf %382, %380 : vector<8x128xf32>
    %384 = arith.mulf %375, %350 : vector<8x128xf32>
    %385 = arith.addf %383, %384 : vector<8x128xf32>
    %386 = vector.broadcast %353 : i32 to vector<8x1xi32>
    %387 = arith.cmpi slt, %386, %13 : vector<8x1xi32>
    %cst_97 = arith.constant 0.000000e+00 : f32
    %388 = vector.shape_cast %387 : vector<8x1xi1> to vector<8x1xi1>
    %389 = vector.broadcast %388 : vector<8x1xi1> to vector<8x128xi1>
    %390 = vector.broadcast %cst_97 : f32 to vector<8x128xf32>
    %391 = arith.select %389, %385, %390 : vector<8x128xi1>, vector<8x128xf32>
    %392 = arith.index_cast %352 : i32 to index
    %c0_98 = arith.constant 0 : index
    %c0_99 = arith.constant 0 : index
    %393 = vector.load %arg6[%392, %c0_98, %c0_99] : memref<8x8x128xf32, #tpu.memory_space<vmem>>, vector<1x8x128xf32>
    %394 = vector.shape_cast %393 : vector<1x8x128xf32> to vector<8x128xf32>
    %395 = vector.shape_cast %391 : vector<8x128xf32> to vector<1x8x128xf32>
    tpu.vector_store %arg6[%392, %c0_98, %c0_99], %395 {strides = array<i32>} : memref<8x8x128xf32, #tpu.memory_space<vmem>>, vector<1x8x128xf32>,
    %396 = vector.shape_cast %387 : vector<8x1xi1> to vector<8x1xi1>
    %397 = vector.broadcast %396 : vector<8x1xi1> to vector<8x128xi1>
    %398 = arith.select %397, %385, %350 : vector<8x128xi1>, vector<8x128xf32>
    %c8_i32_100 = arith.constant 8 : i32
    %c0_101 = arith.constant 0 : index
    %c0_102 = arith.constant 0 : index
    %399 = vector.load %arg7[%c0_101, %c0_102] : memref<8x128xf32, #tpu.memory_space<vmem>>, vector<8x128xf32>
    tpu.vector_store %arg7[%c0_101, %c0_102], %398 {strides = array<i32>} : memref<8x128xf32, #tpu.memory_space<vmem>>, vector<8x128xf32>,
    return
  }
  func.func @transform_0(%arg0: i32, %arg1: i32) -> (i32, i32) {
    %c0_i32 = arith.constant 0 : i32
    %c0_i32_0 = arith.constant 0 : i32
    %c0_i32_1 = arith.constant 0 : i32
    return %c0_i32, %c0_i32_0 : i32, i32
  }
  func.func @transform_1(%arg0: i32, %arg1: i32) -> (i32, i32, i32, i32) {
    %c0_i32 = arith.constant 0 : i32
    %0 = arith.cmpi eq, %arg0, %c0_i32 : i32
    %c0_i32_0 = arith.constant 0 : i32
    %1 = arith.subi %c0_i32_0, %arg1 : i32
    %2 = arith.select %0, %arg1, %1 : i32
    %c0_i32_1 = arith.constant 0 : i32
    %c0_i32_2 = arith.constant 0 : i32
    %c0_i32_3 = arith.constant 0 : i32
    return %arg0, %2, %c0_i32_1, %c0_i32_2 : i32, i32, i32, i32
  }
  func.func @transform_2(%arg0: i32, %arg1: i32) -> (i32, i32, i32) {
    %c0_i32 = arith.constant 0 : i32
    %c0_i32_0 = arith.constant 0 : i32
    %c0_i32_1 = arith.constant 0 : i32
    return %arg0, %c0_i32, %c0_i32_0 : i32, i32, i32
  }
  func.func @transform_3(%arg0: i32, %arg1: i32) -> (i32, i32, i32) {
    %c0_i32 = arith.constant 0 : i32
    %c0_i32_0 = arith.constant 0 : i32
    %c0_i32_1 = arith.constant 0 : i32
    return %arg0, %c0_i32, %c0_i32_0 : i32, i32, i32
  }
  func.func @transform_4(%arg0: i32, %arg1: i32) -> (i32, i32, i32) {
    %c0_i32 = arith.constant 0 : i32
    %0 = arith.cmpi eq, %arg0, %c0_i32 : i32
    %c0_i32_0 = arith.constant 0 : i32
    %1 = arith.subi %c0_i32_0, %arg1 : i32
    %2 = arith.select %0, %arg1, %1 : i32
    %c0_i32_1 = arith.constant 0 : i32
    %c0_i32_2 = arith.constant 0 : i32
    return %2, %c0_i32_1, %arg0 : i32, i32, i32
  }
}

</mosaic_0001>

<llo_original>
// kernel: encoder_forward.2
$region0: #{encoder_forward.2}
  #allocation0 [shape = 'u32[]', space=smem, size = 0x4, offset = 0x4, fixed_abs, tag = 'smem constant byte address 0x4 - core index']
  #allocation1 [shape = 'u32[144,128]{1,0:T(1,128)}', space=vmem, size = 0x12000, scoped, tag = 'internal scratch']
  #allocation2 [shape = 'f32[8,128]{1,0:T(8,128)}', space=vmem, size = 0x1000, scoped, tag = 'scratch operand']
  %s0 = inlined_call_operand.vmem [shape: s32[8,1], index: 0, kind: input, shape index: {}]
  %s1 = inlined_call_operand.vmem [shape: f32[2,8,8,384], index: 1, kind: input, shape index: {}]
  %s2 = inlined_call_operand.vmem [shape: bf16[2,128,384], index: 2, kind: input, shape index: {}]
  %s3 = inlined_call_operand.vmem [shape: f32[2,1,384], index: 3, kind: input, shape index: {}]
  %s4 = inlined_call_operand.vmem [shape: f32[8,8,256], index: 4, kind: output, shape index: {}]
  %s5 = sld [smem:[#allocation0]]
  $region87: #{encoder_forward.2} parent=0
    _
  %s7 = ssub.s32 1, %s5
  %s8 = scalar_select 0, %s7, %s5
  $region1: #{encoder_forward.2} parent=0
    #allocation3 [shape = 'u8[65536]{0}', space=vmem, size = 0x10000, scoped, tag = 'output window, operand 0']
    loop: start=0, step=1, limit=4
    $region2: #{encoder_forward.2} parent=1 // loop_pre_header
      _
    $region3: #{encoder_forward.2} parent=1 // loop_header
      %s10 = sphi 0, %s14
      %p11 = scmp.ge.s32.totalorder %s10, 4
      %s17 = sphi 0, %s29
      %s18 = sphi 0, %s25
      %s19 = sphi 0, %s17
      %s20 = sphi 0, %s18
      %s21 = sphi 0, %s19
      %s22 = sphi 0, %s20
      %s30 = sphi 0, %s30
      %s32 = sphi 0, %s30
      %s33 = sphi 0, %s32
      %s47 = sphi 0, %s33
      %s61 = sphi 0, %s63
      %s64 = sphi 0, %s61
      %s65 = sphi 0, %s64
      %s81 = sphi 0, %s65
      %s87 = sphi 0, %s89
      %s90 = sphi 0, %s87
      %s91 = sphi 0, %s90
      %s107 = sphi 0, %s91
      %s113 = sphi 0, %s115
      %s116 = sphi 0, %s113
      %s117 = sphi 0, %s116
      %s133 = sphi 0, %s117
      %s147 = sphi 0, %s149
      %s150 = sphi 0, %s147
      %s151 = sphi 0, %s150
      %s167 = sphi 0, %s151
    $region4: #{encoder_forward.2} parent=1 // loop_header_branch
      %13 = sbr.rel (%p11) target = $region8
    $region5: #{encoder_forward.2} parent=1 // loop_body
      %s15 = ssub.s32 %s10, 1
      %s16 = ssub.s32 %s10, 2
      %s23 = sadd.s32 1, %s18
      %p24 = scmp.ge.s32.totalorder %s23, 1
      %s25 = scalar_select %p24, 0, %s23
      %s26 = sadd.s32 1, %s17
      %s27 = scalar_select %p24, %s26, %s17
      %p28 = scmp.ge.s32.totalorder %s27, 2
      %s29 = scalar_select %p28, 0, %s27
      %s31 = sadd.s32 %s30, 1
      %p34 = scmp.eq.s32.totalorder %s10, 1
      %p35 = scmp.ne.s32.totalorder %s30, %s32
      %p36 = scmp.eq.s32.totalorder %s10, 0
      %p37 = por %p35, %p36
      %p38 = scmp.ne.s32.totalorder %s30, %s32
      %p39 = scmp.eq.s32.totalorder %s15, 1
      %p40 = por %p38, %p39
      %p41 = scmp.ne.s32.totalorder %s32, %s33
      %p42 = scmp.eq.s32.totalorder %s15, 0
      %p43 = por %p41, %p42
      %p44 = scmp.ne.s32.totalorder %s32, %s33
      %p45 = scmp.eq.s32.totalorder %s16, 1
      %p46 = por %p44, %p45
      %p48 = scmp.ne.s32.totalorder %s33, %s47
      %p49 = scmp.eq.s32.totalorder %s16, 0
      %p50 = por %p48, %p49
      %p51 = scmp.eq.s32.totalorder %s17, 0
      %s52 = ssub.s32 0, %s18
      %s53 = scalar_select %p51, %s18, %s52
      %p54 = scmp.eq.s32.totalorder %s29, 0
      %s55 = ssub.s32 0, %s25
      %s56 = scalar_select %p54, %s25, %s55
      %s57 = ssub.s32 %s17, %s29
      %s58 = ssub.s32 %s53, %s56
      %s59 = sor.u32 %s57, %s58
      %p60 = scmp.eq.s32.totalorder %s59, 0
      %s62 = sadd.s32 %s61, 1
      %s63 = scalar_select %p60, %s61, %s62
      %p66 = pneg %p60
      %p67 = scmp.eq.s32.totalorder %s10, 1
      %p68 = por %p66, %p67
      %p69 = scmp.ne.s32.totalorder %s61, %s64
      %p70 = scmp.eq.s32.totalorder %s10, 0
      %p71 = por %p69, %p70
      %p72 = scmp.ne.s32.totalorder %s61, %s64
      %p73 = scmp.eq.s32.totalorder %s15, 1
      %p74 = por %p72, %p73
      %p75 = scmp.ne.s32.totalorder %s64, %s65
      %p76 = scmp.eq.s32.totalorder %s15, 0
      %p77 = por %p75, %p76
      %p78 = scmp.ne.s32.totalorder %s64, %s65
      %p79 = scmp.eq.s32.totalorder %s16, 1
      %p80 = por %p78, %p79
      %p82 = scmp.ne.s32.totalorder %s65, %s81
      %p83 = scmp.eq.s32.totalorder %s16, 0
      %p84 = por %p82, %p83
      %s85 = ssub.s32 %s17, %s29
      %p86 = scmp.eq.s32.totalorder %s85, 0
      %s88 = sadd.s32 %s87, 1
      %s89 = scalar_select %p86, %s87, %s88
      %p92 = pneg %p86
      %p93 = scmp.eq.s32.totalorder %s10, 1
      %p94 = por %p92, %p93
      %p95 = scmp.ne.s32.totalorder %s87, %s90
      %p96 = scmp.eq.s32.totalorder %s10, 0
      %p97 = por %p95, %p96
      %p98 = scmp.ne.s32.totalorder %s87, %s90
      %p99 = scmp.eq.s32.totalorder %s15, 1
      %p100 = por %p98, %p99
      %p101 = scmp.ne.s32.totalorder %s90, %s91
      %p102 = scmp.eq.s32.totalorder %s15, 0
      %p103 = por %p101, %p102
      %p104 = scmp.ne.s32.totalorder %s90, %s91
      %p105 = scmp.eq.s32.totalorder %s16, 1
      %p106 = por %p104, %p105
      %p108 = scmp.ne.s32.totalorder %s91, %s107
      %p109 = scmp.eq.s32.totalorder %s16, 0
      %p110 = por %p108, %p109
      %s111 = ssub.s32 %s17, %s29
      %p112 = scmp.eq.s32.totalorder %s111, 0
      %s114 = sadd.s32 %s113, 1
      %s115 = scalar_select %p112, %s113, %s114
      %p118 = pneg %p112
      %p119 = scmp.eq.s32.totalorder %s10, 1
      %p120 = por %p118, %p119
      %p121 = scmp.ne.s32.totalorder %s113, %s116
      %p122 = scmp.eq.s32.totalorder %s10, 0
      %p123 = por %p121, %p122
      %p124 = scmp.ne.s32.totalorder %s113, %s116
      %p125 = scmp.eq.s32.totalorder %s15, 1
      %p126 = por %p124, %p125
      %p127 = scmp.ne.s32.totalorder %s116, %s117
      %p128 = scmp.eq.s32.totalorder %s15, 0
      %p129 = por %p127, %p128
      %p130 = scmp.ne.s32.totalorder %s116, %s117
      %p131 = scmp.eq.s32.totalorder %s16, 1
      %p132 = por %p130, %p131
      %p134 = scmp.ne.s32.totalorder %s117, %s133
      %p135 = scmp.eq.s32.totalorder %s16, 0
      %p136 = por %p134, %p135
      %p137 = scmp.eq.s32.totalorder %s17, 0
      %s138 = ssub.s32 0, %s18
      %s139 = scalar_select %p137, %s18, %s138
      %p140 = scmp.eq.s32.totalorder %s29, 0
      %s141 = ssub.s32 0, %s25
      %s142 = scalar_select %p140, %s25, %s141
      %s143 = ssub.s32 %s139, %s142
      %s144 = ssub.s32 %s17, %s29
      %s145 = sor.u32 %s143, %s144
      %p146 = scmp.eq.s32.totalorder %s145, 0
      %s148 = sadd.s32 %s147, 1
      %s149 = scalar_select %p146, %s147, %s148
      %p152 = pneg %p146
      %p153 = scmp.eq.s32.totalorder %s10, 1
      %p154 = por %p152, %p153
      %p155 = scmp.ne.s32.totalorder %s147, %s150
      %p156 = scmp.eq.s32.totalorder %s10, 0
      %p157 = por %p155, %p156
      %p158 = scmp.ne.s32.totalorder %s147, %s150
      %p159 = scmp.eq.s32.totalorder %s15, 1
      %p160 = por %p158, %p159
      %p161 = scmp.ne.s32.totalorder %s150, %s151
      %p162 = scmp.eq.s32.totalorder %s15, 0
      %p163 = por %p161, %p162
      %p164 = scmp.ne.s32.totalorder %s150, %s151
      %p165 = scmp.eq.s32.totalorder %s16, 1
      %p166 = por %p164, %p165
      %p168 = scmp.ne.s32.totalorder %s151, %s167
      %p169 = scmp.eq.s32.totalorder %s16, 0
      %p170 = por %p168, %p169
      %p171 = scmp.le.s32.totalorder 1, %s10
      %p172 = scmp.lt.s32.totalorder %s10, 3
      %p173 = pnand %p171, %p172
      %p174 = pneg %p173
      // Predicated region
      $region9: #{encoder_forward.2} parent=5 // pred_check
        _
      $region10: #{encoder_forward.2} parent=5 // pred_check_branch
        %176 = sbr.rel (%p173) target = $region12
      $region11: #{encoder_forward.2} parent=5 // pred_region
        %s177 = ssub.s32 %s10, 1
        // Predicated region
        $region13: #{encoder_forward.2} parent=11 // pred_check
          %p178 = pneg %p43
        $region14: #{encoder_forward.2} parent=11 // pred_check_branch
          %180 = sbr.rel (%p178) target = $region16
        $region15: #{encoder_forward.2} parent=11 // pred_region
          _
        $region16: #{encoder_forward.2} parent=11 // pred_fallthru
          _
      $region12: #{encoder_forward.2} parent=5 // pred_fallthru
        _
      %p181 = scmp.lt.s32.totalorder %s10, 2
      // Predicated region
      $region17: #{encoder_forward.2} parent=5 // pred_check
        %p182 = pneg %p181
      $region18: #{encoder_forward.2} parent=5 // pred_check_branch
        %184 = sbr.rel (%p182) target = $region20
      $region19: #{encoder_forward.2} parent=5 // pred_region
        // Predicated region
        $region21: #{encoder_forward.2} parent=19 // pred_check
          %p185 = pneg %p71
        $region22: #{encoder_forward.2} parent=19 // pred_check_branch
          %187 = sbr.rel (%p185) target = $region24
        $region23: #{encoder_forward.2} parent=19 // pred_region
          %p188 = scmp.eq.s32.totalorder %s17, 0
          %s189 = ssub.s32 0, %s18
          %s190 = scalar_select %p188, %s18, %s189
          %s191 = smul.u32 8, %s190
          %p192 = scmp.lt.s32.totalorder %s17, 1
          %s193 = scalar_select %p192, %s17, 1
          %p194 = scmp.lt.s32.totalorder %s191, 7
          %s195 = scalar_select %p194, %s191, 7
          %s196 = smul.addr %s195, 3
          %s197 = smul.addr %s193, 24
          %s198 = sadd.s32 %s196, %s197
          %s199 = smul.addr %s198, 8
          %s200 = scalar_lea.vmem %s1, %s199
          %p201 = scmp.eq.s32.totalorder %s17, 0
          %s202 = ssub.s32 0, %s18
          %s203 = scalar_select %p201, %s18, %s202
          %s204 = smul.u32 8, %s203
        $region24: #{encoder_forward.2} parent=19 // pred_fallthru
          _
        // Predicated region
        $region25: #{encoder_forward.2} parent=19 // pred_check
          %p205 = pneg %p97
        $region26: #{encoder_forward.2} parent=19 // pred_check_branch
          %207 = sbr.rel (%p205) target = $region28
        $region27: #{encoder_forward.2} parent=19 // pred_region
          %p208 = scmp.lt.s32.totalorder %s17, 1
          %s209 = scalar_select %p208, %s17, 1
          %s210 = smul.addr %s209, 48
          %s211 = smul.addr %s210, 4
          %s212 = scalar_lea.vmem %s2, %s211
        $region28: #{encoder_forward.2} parent=19 // pred_fallthru
          _
        // Predicated region
        $region29: #{encoder_forward.2} parent=19 // pred_check
          %p213 = pneg %p123
        $region30: #{encoder_forward.2} parent=19 // pred_check_branch
          %215 = sbr.rel (%p213) target = $region32
        $region31: #{encoder_forward.2} parent=19 // pred_region
          %p216 = scmp.lt.s32.totalorder %s17, 1
          %s217 = scalar_select %p216, %s17, 1
          %s218 = smul.addr %s217, 3
          %s219 = scalar_lea.vmem %s3, %s218
        $region32: #{encoder_forward.2} parent=19 // pred_fallthru
          _
      $region20: #{encoder_forward.2} parent=5 // pred_fallthru
        _
      %p220 = scmp.le.s32.totalorder 1, %s10
      %p221 = scmp.lt.s32.totalorder %s10, 3
      %p222 = pnand %p220, %p221
      %p223 = pneg %p222
      // Predicated region
      $region33: #{encoder_forward.2} parent=5 // pred_check
        _
      $region34: #{encoder_forward.2} parent=5 // pred_check_branch
        %225 = sbr.rel (%p222) target = $region36
      $region35: #{encoder_forward.2} parent=5 // pred_region
        %s226 = ssub.s32 %s10, 1
        %p227 = pneg %p43
        %p228 = pneg %p40
        %p229 = scmp.eq.s32.totalorder %s19, 0
        %s230 = ssub.s32 0, %s20
        %s231 = scalar_select %p229, %s20, %s230
        %s232 = smul.u32 8, %s231
        %p233 = scmp.lt.s32.totalorder %s19, 1
        %s234 = scalar_select %p233, %s19, 1
        %p235 = scmp.lt.s32.totalorder %s232, 7
        %s236 = scalar_select %p235, %s232, 7
        %s237 = smul.addr %s236, 3
        %s238 = smul.addr %s234, 24
        %s239 = sadd.s32 %s237, %s238
        %s240 = smul.addr %s239, 8
        %s241 = scalar_lea.vmem %s1, %s240
        %p242 = pneg %p77
        %p243 = pneg %p74
        %p244 = scmp.lt.s32.totalorder %s19, 1
        %s245 = scalar_select %p244, %s19, 1
        %s246 = smul.addr %s245, 48
        %s247 = smul.addr %s246, 4
        %s248 = scalar_lea.vmem %s2, %s247
        %p249 = pneg %p103
        %p250 = pneg %p100
        %p251 = scmp.lt.s32.totalorder %s19, 1
        %s252 = scalar_select %p251, %s19, 1
        %s253 = smul.addr %s252, 3
        %s254 = scalar_lea.vmem %s3, %s253
        %p255 = pneg %p129
        %p256 = pneg %p126
        %p257 = pneg %p163
        %p258 = pneg %p160
        %s259 = sand.u32 %s150, 1
        %s260 = sand.u32 %s150, 1
        %s261 = smul.addr %s260, 64
        %s262 = scalar_lea.vmem [#allocation3], %s261
        %p263 = scmp.eq.s32.totalorder %s19, 0
        %s264 = ssub.s32 0, %s20
        %s265 = scalar_select %p263, %s20, %s264
        %s266 = smul.u32 8, %s265
        %p267 = scmp.lt.s32.totalorder %s19, 1
        %s268 = scalar_select %p267, %s19, 1
        %p269 = scmp.lt.s32.totalorder %s266, 7
        %s270 = scalar_select %p269, %s266, 7
        %s271 = smul.addr %s270, 3
        %s272 = smul.addr %s268, 24
        %s273 = sadd.s32 %s271, %s272
        %s274 = smul.addr %s273, 8
        %s275 = scalar_lea.vmem %s1, %s274
        %p276 = scmp.eq.s32.totalorder %s19, 0
        %s277 = ssub.s32 0, %s20
        %s278 = scalar_select %p276, %s20, %s277
        %s279 = smul.u32 8, %s278
        %p280 = scmp.lt.s32.totalorder %s19, 1
        %s281 = scalar_select %p280, %s19, 1
        %s282 = smul.addr %s281, 48
        %s283 = smul.addr %s282, 4
        %s284 = scalar_lea.vmem %s2, %s283
        %p285 = scmp.lt.s32.totalorder %s19, 1
        %s286 = scalar_select %p285, %s19, 1
        %s287 = smul.addr %s286, 3
        %s288 = scalar_lea.vmem %s3, %s287
        %p289 = scmp.eq.s32.totalorder %s19, 0
        %s290 = ssub.s32 0, %s20
        %s291 = scalar_select %p289, %s20, %s290
        %s292 = smul.u32 8, %s291
        %p294 = scmp.eq.s32.totalorder %s19, 0
        %s295 = ssub.s32 0, %s20
        %s296 = scalar_select %p294, %s20, %s295
        %s297 = smul.u32 %s296, 8
        %p298 = scmp.eq.s32.totalorder %s20, 0
        // Predicated region
        $region37: #{encoder_forward.2} parent=35 // pred_check
          %p299 = pneg %p298
        $region38: #{encoder_forward.2} parent=35 // pred_check_branch
          %301 = sbr.rel (%p299) target = $region40
        $region39: #{encoder_forward.2} parent=35 // pred_region
          %302 = vst [vmem:[#allocation2] sm:$0xff] 0.0
        $region40: #{encoder_forward.2} parent=35 // pred_fallthru
          _
        %v303 = vld [vmem:[%s284] sm:$0xff]
        %v304 = vld [vmem:[%s284 + $0x8] sm:$0xf]
        %v305 = vld [vmem:[%s284 + $0xc] sm:$0xff]
        %v306 = vld [vmem:[%s284 + $0x14] sm:$0xf]
        %v307 = vld [vmem:[%s284 + $0x18] sm:$0xff]
        %v308 = vld [vmem:[%s284 + $0x20] sm:$0xf]
        %v309 = vld [vmem:[%s284 + $0x24] sm:$0xff]
        %v310 = vld [vmem:[%s284 + $0x2c] sm:$0xf]
        %v311 = vld [vmem:[%s284 + $0x30] sm:$0xff]
        %v312 = vld [vmem:[%s284 + $0x38] sm:$0xf]
        %v313 = vld [vmem:[%s284 + $0x3c] sm:$0xff]
        %v314 = vld [vmem:[%s284 + $0x44] sm:$0xf]
        %v315 = vld [vmem:[%s284 + $0x48] sm:$0xff]
        %v316 = vld [vmem:[%s284 + $0x50] sm:$0xf]
        %v317 = vld [vmem:[%s284 + $0x54] sm:$0xff]
        %v318 = vld [vmem:[%s284 + $0x5c] sm:$0xf]
        %v319 = vld [vmem:[%s284 + $0x60] sm:$0xff]
        %v320 = vld [vmem:[%s284 + $0x68] sm:$0xf]
        %v321 = vld [vmem:[%s284 + $0x6c] sm:$0xff]
        %v322 = vld [vmem:[%s284 + $0x74] sm:$0xf]
        %v323 = vld [vmem:[%s284 + $0x78] sm:$0xff]
        %v324 = vld [vmem:[%s284 + $0x80] sm:$0xf]
        %v325 = vld [vmem:[%s284 + $0x84] sm:$0xff]
        %v326 = vld [vmem:[%s284 + $0x8c] sm:$0xf]
        %v327 = vld [vmem:[%s284 + $0x90] sm:$0xff]
        %v328 = vld [vmem:[%s284 + $0x98] sm:$0xf]
        %v329 = vld [vmem:[%s284 + $0x9c] sm:$0xff]
        %v330 = vld [vmem:[%s284 + $0xa4] sm:$0xf]
        %v331 = vld [vmem:[%s284 + $0xa8] sm:$0xff]
        %v332 = vld [vmem:[%s284 + $0xb0] sm:$0xf]
        %v333 = vld [vmem:[%s284 + $0xb4] sm:$0xff]
        %v334 = vld [vmem:[%s284 + $0xbc] sm:$0xf]
        %v335 = vld [vmem:[%s288] sm:$0x7]
        %v337 = vlaneseq
        %v338 = vshrl.u32 %v337, 7
        %v339 = vsub.s32 0, %v338
        %v340 = vrot.slane %v335, %v339
        %v341 = vlaneseq
        %v342 = vshrl.u32 %v341, 7
        %v343 = vsub.s32 1, %v342
        %v344 = vrot.slane %v335, %v343
        %v345 = vlaneseq
        %v346 = vshrl.u32 %v345, 7
        %v347 = vsub.s32 2, %v346
        %v348 = vrot.slane %v335, %v347
        %v352 = vld [vmem:[%s0] sm:$0xff]
        %v353 = vld [vmem:[#allocation2] sm:$0xff]
        %s354 = scalar_select %p294, 0, 7
        %s355 = sadd.s32 %s297, %s354
        %s356 = smul.u32 %s354, 3
        %s357 = smul.addr %s356, 8
        %s358 = scalar_lea.vmem %s275, %s357
        %v359 = vld [vmem:[%s358] sm:$0xff]
        %v360 = vld [vmem:[%s358 + $0x8] sm:$0xff]
        %v361 = vld [vmem:[%s358 + $0x10] sm:$0xff]
        %v362 = vpack.c.bf16 %v353, %v353
        %v395 = vunpack.c.l.b16 %v303
        %v396 = vunpack.c.h.b16 %v303
        %v397 = vunpack.c.l.b16 %v304
        %v398 = vunpack.c.l.b16 %v305
        %v399 = vunpack.c.h.b16 %v305
        %v400 = vunpack.c.l.b16 %v306
        %v401 = vunpack.c.l.b16 %v307
        %v402 = vunpack.c.h.b16 %v307
        %v403 = vunpack.c.l.b16 %v308
        %v404 = vunpack.c.l.b16 %v309
        %v405 = vunpack.c.h.b16 %v309
        %v406 = vunpack.c.l.b16 %v310
        %v407 = vunpack.c.l.b16 %v311
        %v408 = vunpack.c.h.b16 %v311
        %v409 = vunpack.c.l.b16 %v312
        %v410 = vunpack.c.l.b16 %v313
        %v411 = vunpack.c.h.b16 %v313
        %v412 = vunpack.c.l.b16 %v314
        %v413 = vunpack.c.l.b16 %v315
        %v414 = vunpack.c.h.b16 %v315
        %v415 = vunpack.c.l.b16 %v316
        %v416 = vunpack.c.l.b16 %v317
        %v417 = vunpack.c.h.b16 %v317
        %v418 = vunpack.c.l.b16 %v318
        %v419 = vunpack.c.l.b16 %v319
        %v420 = vunpack.c.h.b16 %v319
        %v421 = vunpack.c.l.b16 %v320
        %v422 = vunpack.c.l.b16 %v321
        %v423 = vunpack.c.h.b16 %v321
        %v424 = vunpack.c.l.b16 %v322
        %v425 = vunpack.c.l.b16 %v323
        %v426 = vunpack.c.h.b16 %v323
        %v427 = vunpack.c.l.b16 %v324
        %v428 = vunpack.c.l.b16 %v325
        %v429 = vunpack.c.h.b16 %v325
        %v430 = vunpack.c.l.b16 %v326
        %v431 = vunpack.c.l.b16 %v327
        %v432 = vunpack.c.h.b16 %v327
        %v433 = vunpack.c.l.b16 %v328
        %v434 = vunpack.c.l.b16 %v329
        %v435 = vunpack.c.h.b16 %v329
        %v436 = vunpack.c.l.b16 %v330
        %v437 = vunpack.c.l.b16 %v331
        %v438 = vunpack.c.h.b16 %v331
        %v439 = vunpack.c.l.b16 %v332
        %v440 = vunpack.c.l.b16 %v333
        %v441 = vunpack.c.h.b16 %v333
        %v442 = vunpack.c.l.b16 %v334
        %v443 = vpack.c.b16 %v398, %v395
        %v444 = vpack.c.b16 %v399, %v396
        %v445 = vpack.c.b16 %v400, %v397
        %v446 = vpack.c.b16 %v404, %v401
        %v447 = vpack.c.b16 %v405, %v402
        %v448 = vpack.c.b16 %v406, %v403
        %v449 = vpack.c.b16 %v410, %v407
        %v450 = vpack.c.b16 %v411, %v408
        %v451 = vpack.c.b16 %v412, %v409
        %v452 = vpack.c.b16 %v416, %v413
        %v453 = vpack.c.b16 %v417, %v414
        %v454 = vpack.c.b16 %v418, %v415
        %v455 = vpack.c.b16 %v422, %v419
        %v456 = vpack.c.b16 %v423, %v420
        %v457 = vpack.c.b16 %v424, %v421
        %v458 = vpack.c.b16 %v428, %v425
        %v459 = vpack.c.b16 %v429, %v426
        %v460 = vpack.c.b16 %v430, %v427
        %v461 = vpack.c.b16 %v434, %v431
        %v462 = vpack.c.b16 %v435, %v432
        %v463 = vpack.c.b16 %v436, %v433
        %v464 = vpack.c.b16 %v440, %v437
        %v465 = vpack.c.b16 %v441, %v438
        %v466 = vpack.c.b16 %v442, %v439
        %491 = vmatprep.subr.bf16.mxu0 %v465
        %492 = vmatpush1.bf16.msra.mxu0 %v464
        %493 = vmatprep.subr.bf16.mxu0 %v462
        %494 = vmatpush1.bf16.msra.mxu0 %v461
        %495 = vmatprep.subr.bf16.mxu0 %v459
        %496 = vmatpush1.bf16.msra.mxu0 %v458
        %497 = vmatprep.subr.bf16.mxu0 %v456
        %498 = vmatpush1.bf16.msra.mxu0 %v455
        %499 = vmatprep.subr.bf16.mxu0 %v453
        %500 = vmatpush1.bf16.msra.mxu0 %v452
        %501 = vmatprep.subr.bf16.mxu0 %v450
        %502 = vmatpush1.bf16.msra.mxu0 %v449
        %503 = vmatprep.subr.bf16.mxu0 %v447
        %504 = vmatpush1.bf16.msra.mxu0 %v446
        %505 = vmatprep.subr.bf16.mxu0 %v444
        %506 = vmatpush1.bf16.msra.mxu0 %v443
        %507 = vmatprep.subr.bf16.mxu0 0
        %508 = vmatpush2.bf16.msra.mxu0 0
        %509 = vmatprep.subr.bf16.mxu0 0
        %510 = vmatpush2.bf16.msra.mxu0 0
        %511 = vmatprep.subr.bf16.mxu0 0
        %512 = vmatpush2.bf16.msra.mxu0 0
        %513 = vmatprep.subr.bf16.mxu0 0
        %514 = vmatpush2.bf16.msra.mxu0 0
        %515 = vmatprep.subr.bf16.mxu0 0
        %516 = vmatpush2.bf16.msra.mxu0 0
        %517 = vmatprep.subr.bf16.mxu0 0
        %518 = vmatpush2.bf16.msra.mxu0 0
        %519 = vmatprep.subr.bf16.mxu0 0
        %520 = vmatpush2.bf16.msra.mxu0 0
        %521 = vmatprep.subr.bf16.mxu0 0
        %522 = vmatpush2.bf16.msra.mxu0 0
        %523 = vmatprep.mubr.bf16.mxu0 0
        %524 = vmatmul.mubr.bf16.gmra.mxu0 %v362
        %v525 = vpop.f32.mrf.mxu0
        %v526 = vadd.f32 %v340, %v525
        %v527 = vpop.f32.mrf.mxu0
        %v528 = vadd.f32 %v344, %v527
        %v529 = vpop.f32.mrf.mxu0
        %v530 = vpop.f32.mrf.mxu0
        %531 = vdwg.mxu0
        %532 = vmatprep.subr.bf16.mxu0 0
        %533 = vmatpush1.bf16.msra.mxu0 %v466
        %534 = vmatprep.subr.bf16.mxu0 0
        %535 = vmatpush1.bf16.msra.mxu0 %v463
        %536 = vmatprep.subr.bf16.mxu0 0
        %537 = vmatpush1.bf16.msra.mxu0 %v460
        %538 = vmatprep.subr.bf16.mxu0 0
        %539 = vmatpush1.bf16.msra.mxu0 %v457
        %540 = vmatprep.subr.bf16.mxu0 0
        %541 = vmatpush1.bf16.msra.mxu0 %v454
        %542 = vmatprep.subr.bf16.mxu0 0
        %543 = vmatpush1.bf16.msra.mxu0 %v451
        %544 = vmatprep.subr.bf16.mxu0 0
        %545 = vmatpush1.bf16.msra.mxu0 %v448
        %546 = vmatprep.subr.bf16.mxu0 0
        %547 = vmatpush1.bf16.msra.mxu0 %v445
        %548 = vmatprep.subr.bf16.mxu0 0
        %549 = vmatpush2.bf16.msra.mxu0 0
        %550 = vmatprep.subr.bf16.mxu0 0
        %551 = vmatpush2.bf16.msra.mxu0 0
        %552 = vmatprep.subr.bf16.mxu0 0
        %553 = vmatpush2.bf16.msra.mxu0 0
        %554 = vmatprep.subr.bf16.mxu0 0
        %555 = vmatpush2.bf16.msra.mxu0 0
        %556 = vmatprep.subr.bf16.mxu0 0
        %557 = vmatpush2.bf16.msra.mxu0 0
        %558 = vmatprep.subr.bf16.mxu0 0
        %559 = vmatpush2.bf16.msra.mxu0 0
        %560 = vmatprep.subr.bf16.mxu0 0
        %561 = vmatpush2.bf16.msra.mxu0 0
        %562 = vmatprep.subr.bf16.mxu0 0
        %563 = vmatpush2.bf16.msra.mxu0 0
        %564 = vmatprep.mubr.bf16.mxu0 0
        %565 = vmatmul.mubr.bf16.gmra.mxu0 %v362
        %v566 = vpop.f32.mrf.mxu0
        %v567 = vadd.f32 %v348, %v566
        %v568 = vpop.f32.mrf.mxu0
        %v569 = vpop.f32.mrf.mxu0
        %v570 = vpop.f32.mrf.mxu0
        %571 = vdwg.mxu0
        %v572 = vadd.f32 %v359, %v526
        %v573 = vxor.u32 %v572, 2147483648
        %v574 = vmul.f32 %v573, 1.442695
        %v575 = vpow.pop %v574
        %v576 = vadd.f32 %v575, 1.0
        %v577 = vrcp.pop %v576
        %v578 = vmul.f32 1.0, %v577
        %v579 = vadd.f32 %v360, %v528
        %v580 = vxor.u32 %v579, 2147483648
        %v581 = vmul.f32 %v580, 1.442695
        %v582 = vpow.pop %v581
        %v583 = vadd.f32 %v582, 1.0
        %v584 = vrcp.pop %v583
        %v585 = vmul.f32 1.0, %v584
        %v586 = vmul.f32 %v578, %v567
        %v587 = vadd.f32 %v361, %v586
        %v588 = vtanh.pop %v587
        %v589 = vsub.f32 1.0, %v585
        %v590 = vmul.f32 %v589, %v588
        %v591 = vmul.f32 %v585, %v353
        %v592 = vadd.f32 %v590, %v591
        %v593 = vstv %s355
        %vm594 = vcmp.lt.s32.totalorder %v593, %v352
        %v595 = vsel %vm594, 1, 0
        %596 = vset.pattern.permute.xlu0 0
        %597 = vperm.xlu0 %596, %v595
        %v598 = vpop.permute.xlu0 %597
        %vm599 = vcmp.eq.s32.totalorder %v598, 1
        %v600 = vsel %vm599, %v592, 0.0
        %s601 = smul.u32 %s354, 8
        %s602 = scalar_lea.vmem %s262, %s601 [#allocation3]
        %603 = vst [vmem:[%s602] sm:$0xff] %v600
        %v604 = vsel %vm599, %v592, %v353
        %s605 = scalar_select %p294, 1, 6
        %s606 = sadd.s32 %s297, %s605
        %s607 = smul.u32 %s605, 3
        %s608 = smul.addr %s607, 8
        %s609 = scalar_lea.vmem %s275, %s608
        %v610 = vld [vmem:[%s609] sm:$0xff]
        %v611 = vld [vmem:[%s609 + $0x8] sm:$0xff]
        %v612 = vld [vmem:[%s609 + $0x10] sm:$0xff]
        %v613 = vpack.c.bf16 %v604, %v604
        %614 = vmatprep.subr.bf16.mxu0 %v465
        %615 = vmatpush1.bf16.msra.mxu0 %v464
        %616 = vmatprep.subr.bf16.mxu0 %v462
        %617 = vmatpush1.bf16.msra.mxu0 %v461
        %618 = vmatprep.subr.bf16.mxu0 %v459
        %619 = vmatpush1.bf16.msra.mxu0 %v458
        %620 = vmatprep.subr.bf16.mxu0 %v456
        %621 = vmatpush1.bf16.msra.mxu0 %v455
        %622 = vmatprep.subr.bf16.mxu0 %v453
        %623 = vmatpush1.bf16.msra.mxu0 %v452
        %624 = vmatprep.subr.bf16.mxu0 %v450
        %625 = vmatpush1.bf16.msra.mxu0 %v449
        %626 = vmatprep.subr.bf16.mxu0 %v447
        %627 = vmatpush1.bf16.msra.mxu0 %v446
        %628 = vmatprep.subr.bf16.mxu0 %v444
        %629 = vmatpush1.bf16.msra.mxu0 %v443
        %630 = vmatprep.subr.bf16.mxu0 0
        %631 = vmatpush2.bf16.msra.mxu0 0
        %632 = vmatprep.subr.bf16.mxu0 0
        %633 = vmatpush2.bf16.msra.mxu0 0
        %634 = vmatprep.subr.bf16.mxu0 0
        %635 = vmatpush2.bf16.msra.mxu0 0
        %636 = vmatprep.subr.bf16.mxu0 0
        %637 = vmatpush2.bf16.msra.mxu0 0
        %638 = vmatprep.subr.bf16.mxu0 0
        %639 = vmatpush2.bf16.msra.mxu0 0
        %640 = vmatprep.subr.bf16.mxu0 0
        %641 = vmatpush2.bf16.msra.mxu0 0
        %642 = vmatprep.subr.bf16.mxu0 0
        %643 = vmatpush2.bf16.msra.mxu0 0
        %644 = vmatprep.subr.bf16.mxu0 0
        %645 = vmatpush2.bf16.msra.mxu0 0
        %646 = vmatprep.mubr.bf16.mxu0 0
        %647 = vmatmul.mubr.bf16.gmra.mxu0 %v613
        %v648 = vpop.f32.mrf.mxu0
        %v649 = vadd.f32 %v340, %v648
        %v650 = vpop.f32.mrf.mxu0
        %v651 = vadd.f32 %v344, %v650
        %v652 = vpop.f32.mrf.mxu0
        %v653 = vpop.f32.mrf.mxu0
        %654 = vdwg.mxu0
        %655 = vmatprep.subr.bf16.mxu0 0
        %656 = vmatpush1.bf16.msra.mxu0 %v466
        %657 = vmatprep.subr.bf16.mxu0 0
        %658 = vmatpush1.bf16.msra.mxu0 %v463
        %659 = vmatprep.subr.bf16.mxu0 0
        %660 = vmatpush1.bf16.msra.mxu0 %v460
        %661 = vmatprep.subr.bf16.mxu0 0
        %662 = vmatpush1.bf16.msra.mxu0 %v457
        %663 = vmatprep.subr.bf16.mxu0 0
        %664 = vmatpush1.bf16.msra.mxu0 %v454
        %665 = vmatprep.subr.bf16.mxu0 0
        %666 = vmatpush1.bf16.msra.mxu0 %v451
        %667 = vmatprep.subr.bf16.mxu0 0
        %668 = vmatpush1.bf16.msra.mxu0 %v448
        %669 = vmatprep.subr.bf16.mxu0 0
        %670 = vmatpush1.bf16.msra.mxu0 %v445
        %671 = vmatprep.subr.bf16.mxu0 0
        %672 = vmatpush2.bf16.msra.mxu0 0
        %673 = vmatprep.subr.bf16.mxu0 0
        %674 = vmatpush2.bf16.msra.mxu0 0
        %675 = vmatprep.subr.bf16.mxu0 0
        %676 = vmatpush2.bf16.msra.mxu0 0
        %677 = vmatprep.subr.bf16.mxu0 0
        %678 = vmatpush2.bf16.msra.mxu0 0
        %679 = vmatprep.subr.bf16.mxu0 0
        %680 = vmatpush2.bf16.msra.mxu0 0
        %681 = vmatprep.subr.bf16.mxu0 0
        %682 = vmatpush2.bf16.msra.mxu0 0
        %683 = vmatprep.subr.bf16.mxu0 0
        %684 = vmatpush2.bf16.msra.mxu0 0
        %685 = vmatprep.subr.bf16.mxu0 0
        %686 = vmatpush2.bf16.msra.mxu0 0
        %687 = vmatprep.mubr.bf16.mxu0 0
        %688 = vmatmul.mubr.bf16.gmra.mxu0 %v613
        %v689 = vpop.f32.mrf.mxu0
        %v690 = vadd.f32 %v348, %v689
        %v691 = vpop.f32.mrf.mxu0
        %v692 = vpop.f32.mrf.mxu0
        %v693 = vpop.f32.mrf.mxu0
        %694 = vdwg.mxu0
        %v695 = vadd.f32 %v610, %v649
        %v696 = vxor.u32 %v695, 2147483648
        %v697 = vmul.f32 %v696, 1.442695
        %v698 = vpow.pop %v697
        %v699 = vadd.f32 %v698, 1.0
        %v700 = vrcp.pop %v699
        %v701 = vmul.f32 1.0, %v700
        %v702 = vadd.f32 %v611, %v651
        %v703 = vxor.u32 %v702, 2147483648
        %v704 = vmul.f32 %v703, 1.442695
        %v705 = vpow.pop %v704
        %v706 = vadd.f32 %v705, 1.0
        %v707 = vrcp.pop %v706
        %v708 = vmul.f32 1.0, %v707
        %v709 = vmul.f32 %v701, %v690
        %v710 = vadd.f32 %v612, %v709
        %v711 = vtanh.pop %v710
        %v712 = vsub.f32 1.0, %v708
        %v713 = vmul.f32 %v712, %v711
        %v714 = vmul.f32 %v708, %v604
        %v715 = vadd.f32 %v713, %v714
        %v716 = vstv %s606
        %vm717 = vcmp.lt.s32.totalorder %v716, %v352
        %v718 = vsel %vm717, 1, 0
        %719 = vset.pattern.permute.xlu0 0
        %720 = vperm.xlu0 %719, %v718
        %v721 = vpop.permute.xlu0 %720
        %vm722 = vcmp.eq.s32.totalorder %v721, 1
        %v723 = vsel %vm722, %v715, 0.0
        %s724 = smul.u32 %s605, 8
        %s725 = scalar_lea.vmem %s262, %s724 [#allocation3]
        %726 = vst [vmem:[%s725] sm:$0xff] %v723
        %v727 = vsel %vm722, %v715, %v604
        %s728 = scalar_select %p294, 2, 5
        %s729 = sadd.s32 %s297, %s728
        %s730 = smul.u32 %s728, 3
        %s731 = smul.addr %s730, 8
        %s732 = scalar_lea.vmem %s275, %s731
        %v733 = vld [vmem:[%s732] sm:$0xff]
        %v734 = vld [vmem:[%s732 + $0x8] sm:$0xff]
        %v735 = vld [vmem:[%s732 + $0x10] sm:$0xff]
        %v736 = vpack.c.bf16 %v727, %v727
        %737 = vmatprep.subr.bf16.mxu0 %v465
        %738 = vmatpush1.bf16.msra.mxu0 %v464
        %739 = vmatprep.subr.bf16.mxu0 %v462
        %740 = vmatpush1.bf16.msra.mxu0 %v461
        %741 = vmatprep.subr.bf16.mxu0 %v459
        %742 = vmatpush1.bf16.msra.mxu0 %v458
        %743 = vmatprep.subr.bf16.mxu0 %v456
        %744 = vmatpush1.bf16.msra.mxu0 %v455
        %745 = vmatprep.subr.bf16.mxu0 %v453
        %746 = vmatpush1.bf16.msra.mxu0 %v452
        %747 = vmatprep.subr.bf16.mxu0 %v450
        %748 = vmatpush1.bf16.msra.mxu0 %v449
        %749 = vmatprep.subr.bf16.mxu0 %v447
        %750 = vmatpush1.bf16.msra.mxu0 %v446
        %751 = vmatprep.subr.bf16.mxu0 %v444
        %752 = vmatpush1.bf16.msra.mxu0 %v443
        %753 = vmatprep.subr.bf16.mxu0 0
        %754 = vmatpush2.bf16.msra.mxu0 0
        %755 = vmatprep.subr.bf16.mxu0 0
        %756 = vmatpush2.bf16.msra.mxu0 0
        %757 = vmatprep.subr.bf16.mxu0 0
        %758 = vmatpush2.bf16.msra.mxu0 0
        %759 = vmatprep.subr.bf16.mxu0 0
        %760 = vmatpush2.bf16.msra.mxu0 0
        %761 = vmatprep.subr.bf16.mxu0 0
        %762 = vmatpush2.bf16.msra.mxu0 0
        %763 = vmatprep.subr.bf16.mxu0 0
        %764 = vmatpush2.bf16.msra.mxu0 0
        %765 = vmatprep.subr.bf16.mxu0 0
        %766 = vmatpush2.bf16.msra.mxu0 0
        %767 = vmatprep.subr.bf16.mxu0 0
        %768 = vmatpush2.bf16.msra.mxu0 0
        %769 = vmatprep.mubr.bf16.mxu0 0
        %770 = vmatmul.mubr.bf16.gmra.mxu0 %v736
        %v771 = vpop.f32.mrf.mxu0
        %v772 = vadd.f32 %v340, %v771
        %v773 = vpop.f32.mrf.mxu0
        %v774 = vadd.f32 %v344, %v773
        %v775 = vpop.f32.mrf.mxu0
        %v776 = vpop.f32.mrf.mxu0
        %777 = vdwg.mxu0
        %778 = vmatprep.subr.bf16.mxu0 0
        %779 = vmatpush1.bf16.msra.mxu0 %v466
        %780 = vmatprep.subr.bf16.mxu0 0
        %781 = vmatpush1.bf16.msra.mxu0 %v463
        %782 = vmatprep.subr.bf16.mxu0 0
        %783 = vmatpush1.bf16.msra.mxu0 %v460
        %784 = vmatprep.subr.bf16.mxu0 0
        %785 = vmatpush1.bf16.msra.mxu0 %v457
        %786 = vmatprep.subr.bf16.mxu0 0
        %787 = vmatpush1.bf16.msra.mxu0 %v454
        %788 = vmatprep.subr.bf16.mxu0 0
        %789 = vmatpush1.bf16.msra.mxu0 %v451
        %790 = vmatprep.subr.bf16.mxu0 0
        %791 = vmatpush1.bf16.msra.mxu0 %v448
        %792 = vmatprep.subr.bf16.mxu0 0
        %793 = vmatpush1.bf16.msra.mxu0 %v445
        %794 = vmatprep.subr.bf16.mxu0 0
        %795 = vmatpush2.bf16.msra.mxu0 0
        %796 = vmatprep.subr.bf16.mxu0 0
        %797 = vmatpush2.bf16.msra.mxu0 0
        %798 = vmatprep.subr.bf16.mxu0 0
        %799 = vmatpush2.bf16.msra.mxu0 0
        %800 = vmatprep.subr.bf16.mxu0 0
        %801 = vmatpush2.bf16.msra.mxu0 0
        %802 = vmatprep.subr.bf16.mxu0 0
        %803 = vmatpush2.bf16.msra.mxu0 0
        %804 = vmatprep.subr.bf16.mxu0 0
        %805 = vmatpush2.bf16.msra.mxu0 0
        %806 = vmatprep.subr.bf16.mxu0 0
        %807 = vmatpush2.bf16.msra.mxu0 0
        %808 = vmatprep.subr.bf16.mxu0 0
        %809 = vmatpush2.bf16.msra.mxu0 0
        %810 = vmatprep.mubr.bf16.mxu0 0
        %811 = vmatmul.mubr.bf16.gmra.mxu0 %v736
        %v812 = vpop.f32.mrf.mxu0
        %v813 = vadd.f32 %v348, %v812
        %v814 = vpop.f32.mrf.mxu0
        %v815 = vpop.f32.mrf.mxu0
        %v816 = vpop.f32.mrf.mxu0
        %817 = vdwg.mxu0
        %v818 = vadd.f32 %v733, %v772
        %v819 = vxor.u32 %v818, 2147483648
        %v820 = vmul.f32 %v819, 1.442695
        %v821 = vpow.pop %v820
        %v822 = vadd.f32 %v821, 1.0
        %v823 = vrcp.pop %v822
        %v824 = vmul.f32 1.0, %v823
        %v825 = vadd.f32 %v734, %v774
        %v826 = vxor.u32 %v825, 2147483648
        %v827 = vmul.f32 %v826, 1.442695
        %v828 = vpow.pop %v827
        %v829 = vadd.f32 %v828, 1.0
        %v830 = vrcp.pop %v829
        %v831 = vmul.f32 1.0, %v830
        %v832 = vmul.f32 %v824, %v813
        %v833 = vadd.f32 %v735, %v832
        %v834 = vtanh.pop %v833
        %v835 = vsub.f32 1.0, %v831
        %v836 = vmul.f32 %v835, %v834
        %v837 = vmul.f32 %v831, %v727
        %v838 = vadd.f32 %v836, %v837
        %v839 = vstv %s729
        %vm840 = vcmp.lt.s32.totalorder %v839, %v352
        %v841 = vsel %vm840, 1, 0
        %842 = vset.pattern.permute.xlu0 0
        %843 = vperm.xlu0 %842, %v841
        %v844 = vpop.permute.xlu0 %843
        %vm845 = vcmp.eq.s32.totalorder %v844, 1
        %v846 = vsel %vm845, %v838, 0.0
        %s847 = smul.u32 %s728, 8
        %s848 = scalar_lea.vmem %s262, %s847 [#allocation3]
        %849 = vst [vmem:[%s848] sm:$0xff] %v846
        %v850 = vsel %vm845, %v838, %v727
        %s851 = scalar_select %p294, 3, 4
        %s852 = sadd.s32 %s297, %s851
        %s853 = smul.u32 %s851, 3
        %s854 = smul.addr %s853, 8
        %s855 = scalar_lea.vmem %s275, %s854
        %v856 = vld [vmem:[%s855] sm:$0xff]
        %v857 = vld [vmem:[%s855 + $0x8] sm:$0xff]
        %v858 = vld [vmem:[%s855 + $0x10] sm:$0xff]
        %v859 = vpack.c.bf16 %v850, %v850
        %860 = vmatprep.subr.bf16.mxu0 %v465
        %861 = vmatpush1.bf16.msra.mxu0 %v464
        %862 = vmatprep.subr.bf16.mxu0 %v462
        %863 = vmatpush1.bf16.msra.mxu0 %v461
        %864 = vmatprep.subr.bf16.mxu0 %v459
        %865 = vmatpush1.bf16.msra.mxu0 %v458
        %866 = vmatprep.subr.bf16.mxu0 %v456
        %867 = vmatpush1.bf16.msra.mxu0 %v455
        %868 = vmatprep.subr.bf16.mxu0 %v453
        %869 = vmatpush1.bf16.msra.mxu0 %v452
        %870 = vmatprep.subr.bf16.mxu0 %v450
        %871 = vmatpush1.bf16.msra.mxu0 %v449
        %872 = vmatprep.subr.bf16.mxu0 %v447
        %873 = vmatpush1.bf16.msra.mxu0 %v446
        %874 = vmatprep.subr.bf16.mxu0 %v444
        %875 = vmatpush1.bf16.msra.mxu0 %v443
        %876 = vmatprep.subr.bf16.mxu0 0
        %877 = vmatpush2.bf16.msra.mxu0 0
        %878 = vmatprep.subr.bf16.mxu0 0
        %879 = vmatpush2.bf16.msra.mxu0 0
        %880 = vmatprep.subr.bf16.mxu0 0
        %881 = vmatpush2.bf16.msra.mxu0 0
        %882 = vmatprep.subr.bf16.mxu0 0
        %883 = vmatpush2.bf16.msra.mxu0 0
        %884 = vmatprep.subr.bf16.mxu0 0
        %885 = vmatpush2.bf16.msra.mxu0 0
        %886 = vmatprep.subr.bf16.mxu0 0
        %887 = vmatpush2.bf16.msra.mxu0 0
        %888 = vmatprep.subr.bf16.mxu0 0
        %889 = vmatpush2.bf16.msra.mxu0 0
        %890 = vmatprep.subr.bf16.mxu0 0
        %891 = vmatpush2.bf16.msra.mxu0 0
        %892 = vmatprep.mubr.bf16.mxu0 0
        %893 = vmatmul.mubr.bf16.gmra.mxu0 %v859
        %v894 = vpop.f32.mrf.mxu0
        %v895 = vadd.f32 %v340, %v894
        %v896 = vpop.f32.mrf.mxu0
        %v897 = vadd.f32 %v344, %v896
        %v898 = vpop.f32.mrf.mxu0
        %v899 = vpop.f32.mrf.mxu0
        %900 = vdwg.mxu0
        %901 = vmatprep.subr.bf16.mxu0 0
        %902 = vmatpush1.bf16.msra.mxu0 %v466
        %903 = vmatprep.subr.bf16.mxu0 0
        %904 = vmatpush1.bf16.msra.mxu0 %v463
        %905 = vmatprep.subr.bf16.mxu0 0
        %906 = vmatpush1.bf16.msra.mxu0 %v460
        %907 = vmatprep.subr.bf16.mxu0 0
        %908 = vmatpush1.bf16.msra.mxu0 %v457
        %909 = vmatprep.subr.bf16.mxu0 0
        %910 = vmatpush1.bf16.msra.mxu0 %v454
        %911 = vmatprep.subr.bf16.mxu0 0
        %912 = vmatpush1.bf16.msra.mxu0 %v451
        %913 = vmatprep.subr.bf16.mxu0 0
        %914 = vmatpush1.bf16.msra.mxu0 %v448
        %915 = vmatprep.subr.bf16.mxu0 0
        %916 = vmatpush1.bf16.msra.mxu0 %v445
        %917 = vmatprep.subr.bf16.mxu0 0
        %918 = vmatpush2.bf16.msra.mxu0 0
        %919 = vmatprep.subr.bf16.mxu0 0
        %920 = vmatpush2.bf16.msra.mxu0 0
        %921 = vmatprep.subr.bf16.mxu0 0
        %922 = vmatpush2.bf16.msra.mxu0 0
        %923 = vmatprep.subr.bf16.mxu0 0
        %924 = vmatpush2.bf16.msra.mxu0 0
        %925 = vmatprep.subr.bf16.mxu0 0
        %926 = vmatpush2.bf16.msra.mxu0 0
        %927 = vmatprep.subr.bf16.mxu0 0
        %928 = vmatpush2.bf16.msra.mxu0 0
        %929 = vmatprep.subr.bf16.mxu0 0
        %930 = vmatpush2.bf16.msra.mxu0 0
        %931 = vmatprep.subr.bf16.mxu0 0
        %932 = vmatpush2.bf16.msra.mxu0 0
        %933 = vmatprep.mubr.bf16.mxu0 0
        %934 = vmatmul.mubr.bf16.gmra.mxu0 %v859
        %v935 = vpop.f32.mrf.mxu0
        %v936 = vadd.f32 %v348, %v935
        %v937 = vpop.f32.mrf.mxu0
        %v938 = vpop.f32.mrf.mxu0
        %v939 = vpop.f32.mrf.mxu0
        %940 = vdwg.mxu0
        %v941 = vadd.f32 %v856, %v895
        %v942 = vxor.u32 %v941, 2147483648
        %v943 = vmul.f32 %v942, 1.442695
        %v944 = vpow.pop %v943
        %v945 = vadd.f32 %v944, 1.0
        %v946 = vrcp.pop %v945
        %v947 = vmul.f32 1.0, %v946
        %v948 = vadd.f32 %v857, %v897
        %v949 = vxor.u32 %v948, 2147483648
        %v950 = vmul.f32 %v949, 1.442695
        %v951 = vpow.pop %v950
        %v952 = vadd.f32 %v951, 1.0
        %v953 = vrcp.pop %v952
        %v954 = vmul.f32 1.0, %v953
        %v955 = vmul.f32 %v947, %v936
        %v956 = vadd.f32 %v858, %v955
        %v957 = vtanh.pop %v956
        %v958 = vsub.f32 1.0, %v954
        %v959 = vmul.f32 %v958, %v957
        %v960 = vmul.f32 %v954, %v850
        %v961 = vadd.f32 %v959, %v960
        %v962 = vstv %s852
        %vm963 = vcmp.lt.s32.totalorder %v962, %v352
        %v964 = vsel %vm963, 1, 0
        %965 = vset.pattern.permute.xlu0 0
        %966 = vperm.xlu0 %965, %v964
        %v967 = vpop.permute.xlu0 %966
        %vm968 = vcmp.eq.s32.totalorder %v967, 1
        %v969 = vsel %vm968, %v961, 0.0
        %s970 = smul.u32 %s851, 8
        %s971 = scalar_lea.vmem %s262, %s970 [#allocation3]
        %972 = vst [vmem:[%s971] sm:$0xff] %v969
        %v973 = vsel %vm968, %v961, %v850
        %s974 = scalar_select %p294, 4, 3
        %s975 = sadd.s32 %s297, %s974
        %s976 = smul.u32 %s974, 3
        %s977 = smul.addr %s976, 8
        %s978 = scalar_lea.vmem %s275, %s977
        %v979 = vld [vmem:[%s978] sm:$0xff]
        %v980 = vld [vmem:[%s978 + $0x8] sm:$0xff]
        %v981 = vld [vmem:[%s978 + $0x10] sm:$0xff]
        %v982 = vpack.c.bf16 %v973, %v973
        %983 = vmatprep.subr.bf16.mxu0 %v465
        %984 = vmatpush1.bf16.msra.mxu0 %v464
        %985 = vmatprep.subr.bf16.mxu0 %v462
        %986 = vmatpush1.bf16.msra.mxu0 %v461
        %987 = vmatprep.subr.bf16.mxu0 %v459
        %988 = vmatpush1.bf16.msra.mxu0 %v458
        %989 = vmatprep.subr.bf16.mxu0 %v456
        %990 = vmatpush1.bf16.msra.mxu0 %v455
        %991 = vmatprep.subr.bf16.mxu0 %v453
        %992 = vmatpush1.bf16.msra.mxu0 %v452
        %993 = vmatprep.subr.bf16.mxu0 %v450
        %994 = vmatpush1.bf16.msra.mxu0 %v449
        %995 = vmatprep.subr.bf16.mxu0 %v447
        %996 = vmatpush1.bf16.msra.mxu0 %v446
        %997 = vmatprep.subr.bf16.mxu0 %v444
        %998 = vmatpush1.bf16.msra.mxu0 %v443
        %999 = vmatprep.subr.bf16.mxu0 0
        %1000 = vmatpush2.bf16.msra.mxu0 0
        %1001 = vmatprep.subr.bf16.mxu0 0
        %1002 = vmatpush2.bf16.msra.mxu0 0
        %1003 = vmatprep.subr.bf16.mxu0 0
        %1004 = vmatpush2.bf16.msra.mxu0 0
        %1005 = vmatprep.subr.bf16.mxu0 0
        %1006 = vmatpush2.bf16.msra.mxu0 0
        %1007 = vmatprep.subr.bf16.mxu0 0
        %1008 = vmatpush2.bf16.msra.mxu0 0
        %1009 = vmatprep.subr.bf16.mxu0 0
        %1010 = vmatpush2.bf16.msra.mxu0 0
        %1011 = vmatprep.subr.bf16.mxu0 0
        %1012 = vmatpush2.bf16.msra.mxu0 0
        %1013 = vmatprep.subr.bf16.mxu0 0
        %1014 = vmatpush2.bf16.msra.mxu0 0
        %1015 = vmatprep.mubr.bf16.mxu0 0
        %1016 = vmatmul.mubr.bf16.gmra.mxu0 %v982
        %v1017 = vpop.f32.mrf.mxu0
        %v1018 = vadd.f32 %v340, %v1017
        %v1019 = vpop.f32.mrf.mxu0
        %v1020 = vadd.f32 %v344, %v1019
        %v1021 = vpop.f32.mrf.mxu0
        %v1022 = vpop.f32.mrf.mxu0
        %1023 = vdwg.mxu0
        %1024 = vmatprep.subr.bf16.mxu0 0
        %1025 = vmatpush1.bf16.msra.mxu0 %v466
        %1026 = vmatprep.subr.bf16.mxu0 0
        %1027 = vmatpush1.bf16.msra.mxu0 %v463
        %1028 = vmatprep.subr.bf16.mxu0 0
        %1029 = vmatpush1.bf16.msra.mxu0 %v460
        %1030 = vmatprep.subr.bf16.mxu0 0
        %1031 = vmatpush1.bf16.msra.mxu0 %v457
        %1032 = vmatprep.subr.bf16.mxu0 0
        %1033 = vmatpush1.bf16.msra.mxu0 %v454
        %1034 = vmatprep.subr.bf16.mxu0 0
        %1035 = vmatpush1.bf16.msra.mxu0 %v451
        %1036 = vmatprep.subr.bf16.mxu0 0
        %1037 = vmatpush1.bf16.msra.mxu0 %v448
        %1038 = vmatprep.subr.bf16.mxu0 0
        %1039 = vmatpush1.bf16.msra.mxu0 %v445
        %1040 = vmatprep.subr.bf16.mxu0 0
        %1041 = vmatpush2.bf16.msra.mxu0 0
        %1042 = vmatprep.subr.bf16.mxu0 0
        %1043 = vmatpush2.bf16.msra.mxu0 0
        %1044 = vmatprep.subr.bf16.mxu0 0
        %1045 = vmatpush2.bf16.msra.mxu0 0
        %1046 = vmatprep.subr.bf16.mxu0 0
        %1047 = vmatpush2.bf16.msra.mxu0 0
        %1048 = vmatprep.subr.bf16.mxu0 0
        %1049 = vmatpush2.bf16.msra.mxu0 0
        %1050 = vmatprep.subr.bf16.mxu0 0
        %1051 = vmatpush2.bf16.msra.mxu0 0
        %1052 = vmatprep.subr.bf16.mxu0 0
        %1053 = vmatpush2.bf16.msra.mxu0 0
        %1054 = vmatprep.subr.bf16.mxu0 0
        %1055 = vmatpush2.bf16.msra.mxu0 0
        %1056 = vmatprep.mubr.bf16.mxu0 0
        %1057 = vmatmul.mubr.bf16.gmra.mxu0 %v982
        %v1058 = vpop.f32.mrf.mxu0
        %v1059 = vadd.f32 %v348, %v1058
        %v1060 = vpop.f32.mrf.mxu0
        %v1061 = vpop.f32.mrf.mxu0
        %v1062 = vpop.f32.mrf.mxu0
        %1063 = vdwg.mxu0
        %v1064 = vadd.f32 %v979, %v1018
        %v1065 = vxor.u32 %v1064, 2147483648
        %v1066 = vmul.f32 %v1065, 1.442695
        %v1067 = vpow.pop %v1066
        %v1068 = vadd.f32 %v1067, 1.0
        %v1069 = vrcp.pop %v1068
        %v1070 = vmul.f32 1.0, %v1069
        %v1071 = vadd.f32 %v980, %v1020
        %v1072 = vxor.u32 %v1071, 2147483648
        %v1073 = vmul.f32 %v1072, 1.442695
        %v1074 = vpow.pop %v1073
        %v1075 = vadd.f32 %v1074, 1.0
        %v1076 = vrcp.pop %v1075
        %v1077 = vmul.f32 1.0, %v1076
        %v1078 = vmul.f32 %v1070, %v1059
        %v1079 = vadd.f32 %v981, %v1078
        %v1080 = vtanh.pop %v1079
        %v1081 = vsub.f32 1.0, %v1077
        %v1082 = vmul.f32 %v1081, %v1080
        %v1083 = vmul.f32 %v1077, %v973
        %v1084 = vadd.f32 %v1082, %v1083
        %v1085 = vstv %s975
        %vm1086 = vcmp.lt.s32.totalorder %v1085, %v352
        %v1087 = vsel %vm1086, 1, 0
        %1088 = vset.pattern.permute.xlu0 0
        %1089 = vperm.xlu0 %1088, %v1087
        %v1090 = vpop.permute.xlu0 %1089
        %vm1091 = vcmp.eq.s32.totalorder %v1090, 1
        %v1092 = vsel %vm1091, %v1084, 0.0
        %s1093 = smul.u32 %s974, 8
        %s1094 = scalar_lea.vmem %s262, %s1093 [#allocation3]
        %1095 = vst [vmem:[%s1094] sm:$0xff] %v1092
        %v1096 = vsel %vm1091, %v1084, %v973
        %s1097 = scalar_select %p294, 5, 2
        %s1098 = sadd.s32 %s297, %s1097
        %s1099 = smul.u32 %s1097, 3
        %s1100 = smul.addr %s1099, 8
        %s1101 = scalar_lea.vmem %s275, %s1100
        %v1102 = vld [vmem:[%s1101] sm:$0xff]
        %v1103 = vld [vmem:[%s1101 + $0x8] sm:$0xff]
        %v1104 = vld [vmem:[%s1101 + $0x10] sm:$0xff]
        %v1105 = vpack.c.bf16 %v1096, %v1096
        %1106 = vmatprep.subr.bf16.mxu0 %v465
        %1107 = vmatpush1.bf16.msra.mxu0 %v464
        %1108 = vmatprep.subr.bf16.mxu0 %v462
        %1109 = vmatpush1.bf16.msra.mxu0 %v461
        %1110 = vmatprep.subr.bf16.mxu0 %v459
        %1111 = vmatpush1.bf16.msra.mxu0 %v458
        %1112 = vmatprep.subr.bf16.mxu0 %v456
        %1113 = vmatpush1.bf16.msra.mxu0 %v455
        %1114 = vmatprep.subr.bf16.mxu0 %v453
        %1115 = vmatpush1.bf16.msra.mxu0 %v452
        %1116 = vmatprep.subr.bf16.mxu0 %v450
        %1117 = vmatpush1.bf16.msra.mxu0 %v449
        %1118 = vmatprep.subr.bf16.mxu0 %v447
        %1119 = vmatpush1.bf16.msra.mxu0 %v446
        %1120 = vmatprep.subr.bf16.mxu0 %v444
        %1121 = vmatpush1.bf16.msra.mxu0 %v443
        %1122 = vmatprep.subr.bf16.mxu0 0
        %1123 = vmatpush2.bf16.msra.mxu0 0
        %1124 = vmatprep.subr.bf16.mxu0 0
        %1125 = vmatpush2.bf16.msra.mxu0 0
        %1126 = vmatprep.subr.bf16.mxu0 0
        %1127 = vmatpush2.bf16.msra.mxu0 0
        %1128 = vmatprep.subr.bf16.mxu0 0
        %1129 = vmatpush2.bf16.msra.mxu0 0
        %1130 = vmatprep.subr.bf16.mxu0 0
        %1131 = vmatpush2.bf16.msra.mxu0 0
        %1132 = vmatprep.subr.bf16.mxu0 0
        %1133 = vmatpush2.bf16.msra.mxu0 0
        %1134 = vmatprep.subr.bf16.mxu0 0
        %1135 = vmatpush2.bf16.msra.mxu0 0
        %1136 = vmatprep.subr.bf16.mxu0 0
        %1137 = vmatpush2.bf16.msra.mxu0 0
        %1138 = vmatprep.mubr.bf16.mxu0 0
        %1139 = vmatmul.mubr.bf16.gmra.mxu0 %v1105
        %v1140 = vpop.f32.mrf.mxu0
        %v1141 = vadd.f32 %v340, %v1140
        %v1142 = vpop.f32.mrf.mxu0
        %v1143 = vadd.f32 %v344, %v1142
        %v1144 = vpop.f32.mrf.mxu0
        %v1145 = vpop.f32.mrf.mxu0
        %1146 = vdwg.mxu0
        %1147 = vmatprep.subr.bf16.mxu0 0
        %1148 = vmatpush1.bf16.msra.mxu0 %v466
        %1149 = vmatprep.subr.bf16.mxu0 0
        %1150 = vmatpush1.bf16.msra.mxu0 %v463
        %1151 = vmatprep.subr.bf16.mxu0 0
        %1152 = vmatpush1.bf16.msra.mxu0 %v460
        %1153 = vmatprep.subr.bf16.mxu0 0
        %1154 = vmatpush1.bf16.msra.mxu0 %v457
        %1155 = vmatprep.subr.bf16.mxu0 0
        %1156 = vmatpush1.bf16.msra.mxu0 %v454
        %1157 = vmatprep.subr.bf16.mxu0 0
        %1158 = vmatpush1.bf16.msra.mxu0 %v451
        %1159 = vmatprep.subr.bf16.mxu0 0
        %1160 = vmatpush1.bf16.msra.mxu0 %v448
        %1161 = vmatprep.subr.bf16.mxu0 0
        %1162 = vmatpush1.bf16.msra.mxu0 %v445
        %1163 = vmatprep.subr.bf16.mxu0 0
        %1164 = vmatpush2.bf16.msra.mxu0 0
        %1165 = vmatprep.subr.bf16.mxu0 0
        %1166 = vmatpush2.bf16.msra.mxu0 0
        %1167 = vmatprep.subr.bf16.mxu0 0
        %1168 = vmatpush2.bf16.msra.mxu0 0
        %1169 = vmatprep.subr.bf16.mxu0 0
        %1170 = vmatpush2.bf16.msra.mxu0 0
        %1171 = vmatprep.subr.bf16.mxu0 0
        %1172 = vmatpush2.bf16.msra.mxu0 0
        %1173 = vmatprep.subr.bf16.mxu0 0
        %1174 = vmatpush2.bf16.msra.mxu0 0
        %1175 = vmatprep.subr.bf16.mxu0 0
        %1176 = vmatpush2.bf16.msra.mxu0 0
        %1177 = vmatprep.subr.bf16.mxu0 0
        %1178 = vmatpush2.bf16.msra.mxu0 0
        %1179 = vmatprep.mubr.bf16.mxu0 0
        %1180 = vmatmul.mubr.bf16.gmra.mxu0 %v1105
        %v1181 = vpop.f32.mrf.mxu0
        %v1182 = vadd.f32 %v348, %v1181
        %v1183 = vpop.f32.mrf.mxu0
        %v1184 = vpop.f32.mrf.mxu0
        %v1185 = vpop.f32.mrf.mxu0
        %1186 = vdwg.mxu0
        %v1187 = vadd.f32 %v1102, %v1141
        %v1188 = vxor.u32 %v1187, 2147483648
        %v1189 = vmul.f32 %v1188, 1.442695
        %v1190 = vpow.pop %v1189
        %v1191 = vadd.f32 %v1190, 1.0
        %v1192 = vrcp.pop %v1191
        %v1193 = vmul.f32 1.0, %v1192
        %v1194 = vadd.f32 %v1103, %v1143
        %v1195 = vxor.u32 %v1194, 2147483648
        %v1196 = vmul.f32 %v1195, 1.442695
        %v1197 = vpow.pop %v1196
        %v1198 = vadd.f32 %v1197, 1.0
        %v1199 = vrcp.pop %v1198
        %v1200 = vmul.f32 1.0, %v1199
        %v1201 = vmul.f32 %v1193, %v1182
        %v1202 = vadd.f32 %v1104, %v1201
        %v1203 = vtanh.pop %v1202
        %v1204 = vsub.f32 1.0, %v1200
        %v1205 = vmul.f32 %v1204, %v1203
        %v1206 = vmul.f32 %v1200, %v1096
        %v1207 = vadd.f32 %v1205, %v1206
        %v1208 = vstv %s1098
        %vm1209 = vcmp.lt.s32.totalorder %v1208, %v352
        %v1210 = vsel %vm1209, 1, 0
        %1211 = vset.pattern.permute.xlu0 0
        %1212 = vperm.xlu0 %1211, %v1210
        %v1213 = vpop.permute.xlu0 %1212
        %vm1214 = vcmp.eq.s32.totalorder %v1213, 1
        %v1215 = vsel %vm1214, %v1207, 0.0
        %s1216 = smul.u32 %s1097, 8
        %s1217 = scalar_lea.vmem %s262, %s1216 [#allocation3]
        %1218 = vst [vmem:[%s1217] sm:$0xff] %v1215
        %v1219 = vsel %vm1214, %v1207, %v1096
        %s1220 = scalar_select %p294, 6, 1
        %s1221 = sadd.s32 %s297, %s1220
        %s1222 = smul.u32 %s1220, 3
        %s1223 = smul.addr %s1222, 8
        %s1224 = scalar_lea.vmem %s275, %s1223
        %v1225 = vld [vmem:[%s1224] sm:$0xff]
        %v1226 = vld [vmem:[%s1224 + $0x8] sm:$0xff]
        %v1227 = vld [vmem:[%s1224 + $0x10] sm:$0xff]
        %v1228 = vpack.c.bf16 %v1219, %v1219
        %1229 = vmatprep.subr.bf16.mxu0 %v465
        %1230 = vmatpush1.bf16.msra.mxu0 %v464
        %1231 = vmatprep.subr.bf16.mxu0 %v462
        %1232 = vmatpush1.bf16.msra.mxu0 %v461
        %1233 = vmatprep.subr.bf16.mxu0 %v459
        %1234 = vmatpush1.bf16.msra.mxu0 %v458
        %1235 = vmatprep.subr.bf16.mxu0 %v456
        %1236 = vmatpush1.bf16.msra.mxu0 %v455
        %1237 = vmatprep.subr.bf16.mxu0 %v453
        %1238 = vmatpush1.bf16.msra.mxu0 %v452
        %1239 = vmatprep.subr.bf16.mxu0 %v450
        %1240 = vmatpush1.bf16.msra.mxu0 %v449
        %1241 = vmatprep.subr.bf16.mxu0 %v447
        %1242 = vmatpush1.bf16.msra.mxu0 %v446
        %1243 = vmatprep.subr.bf16.mxu0 %v444
        %1244 = vmatpush1.bf16.msra.mxu0 %v443
        %1245 = vmatprep.subr.bf16.mxu0 0
        %1246 = vmatpush2.bf16.msra.mxu0 0
        %1247 = vmatprep.subr.bf16.mxu0 0
        %1248 = vmatpush2.bf16.msra.mxu0 0
        %1249 = vmatprep.subr.bf16.mxu0 0
        %1250 = vmatpush2.bf16.msra.mxu0 0
        %1251 = vmatprep.subr.bf16.mxu0 0
        %1252 = vmatpush2.bf16.msra.mxu0 0
        %1253 = vmatprep.subr.bf16.mxu0 0
        %1254 = vmatpush2.bf16.msra.mxu0 0
        %1255 = vmatprep.subr.bf16.mxu0 0
        %1256 = vmatpush2.bf16.msra.mxu0 0
        %1257 = vmatprep.subr.bf16.mxu0 0
        %1258 = vmatpush2.bf16.msra.mxu0 0
        %1259 = vmatprep.subr.bf16.mxu0 0
        %1260 = vmatpush2.bf16.msra.mxu0 0
        %1261 = vmatprep.mubr.bf16.mxu0 0
        %1262 = vmatmul.mubr.bf16.gmra.mxu0 %v1228
        %v1263 = vpop.f32.mrf.mxu0
        %v1264 = vadd.f32 %v340, %v1263
        %v1265 = vpop.f32.mrf.mxu0
        %v1266 = vadd.f32 %v344, %v1265
        %v1267 = vpop.f32.mrf.mxu0
        %v1268 = vpop.f32.mrf.mxu0
        %1269 = vdwg.mxu0
        %1270 = vmatprep.subr.bf16.mxu0 0
        %1271 = vmatpush1.bf16.msra.mxu0 %v466
        %1272 = vmatprep.subr.bf16.mxu0 0
        %1273 = vmatpush1.bf16.msra.mxu0 %v463
        %1274 = vmatprep.subr.bf16.mxu0 0
        %1275 = vmatpush1.bf16.msra.mxu0 %v460
        %1276 = vmatprep.subr.bf16.mxu0 0
        %1277 = vmatpush1.bf16.msra.mxu0 %v457
        %1278 = vmatprep.subr.bf16.mxu0 0
        %1279 = vmatpush1.bf16.msra.mxu0 %v454
        %1280 = vmatprep.subr.bf16.mxu0 0
        %1281 = vmatpush1.bf16.msra.mxu0 %v451
        %1282 = vmatprep.subr.bf16.mxu0 0
        %1283 = vmatpush1.bf16.msra.mxu0 %v448
        %1284 = vmatprep.subr.bf16.mxu0 0
        %1285 = vmatpush1.bf16.msra.mxu0 %v445
        %1286 = vmatprep.subr.bf16.mxu0 0
        %1287 = vmatpush2.bf16.msra.mxu0 0
        %1288 = vmatprep.subr.bf16.mxu0 0
        %1289 = vmatpush2.bf16.msra.mxu0 0
        %1290 = vmatprep.subr.bf16.mxu0 0
        %1291 = vmatpush2.bf16.msra.mxu0 0
        %1292 = vmatprep.subr.bf16.mxu0 0
        %1293 = vmatpush2.bf16.msra.mxu0 0
        %1294 = vmatprep.subr.bf16.mxu0 0
        %1295 = vmatpush2.bf16.msra.mxu0 0
        %1296 = vmatprep.subr.bf16.mxu0 0
        %1297 = vmatpush2.bf16.msra.mxu0 0
        %1298 = vmatprep.subr.bf16.mxu0 0
        %1299 = vmatpush2.bf16.msra.mxu0 0
        %1300 = vmatprep.subr.bf16.mxu0 0
        %1301 = vmatpush2.bf16.msra.mxu0 0
        %1302 = vmatprep.mubr.bf16.mxu0 0
        %1303 = vmatmul.mubr.bf16.gmra.mxu0 %v1228
        %v1304 = vpop.f32.mrf.mxu0
        %v1305 = vadd.f32 %v348, %v1304
        %v1306 = vpop.f32.mrf.mxu0
        %v1307 = vpop.f32.mrf.mxu0
        %v1308 = vpop.f32.mrf.mxu0
        %1309 = vdwg.mxu0
        %v1310 = vadd.f32 %v1225, %v1264
        %v1311 = vxor.u32 %v1310, 2147483648
        %v1312 = vmul.f32 %v1311, 1.442695
        %v1313 = vpow.pop %v1312
        %v1314 = vadd.f32 %v1313, 1.0
        %v1315 = vrcp.pop %v1314
        %v1316 = vmul.f32 1.0, %v1315
        %v1317 = vadd.f32 %v1226, %v1266
        %v1318 = vxor.u32 %v1317, 2147483648
        %v1319 = vmul.f32 %v1318, 1.442695
        %v1320 = vpow.pop %v1319
        %v1321 = vadd.f32 %v1320, 1.0
        %v1322 = vrcp.pop %v1321
        %v1323 = vmul.f32 1.0, %v1322
        %v1324 = vmul.f32 %v1316, %v1305
        %v1325 = vadd.f32 %v1227, %v1324
        %v1326 = vtanh.pop %v1325
        %v1327 = vsub.f32 1.0, %v1323
        %v1328 = vmul.f32 %v1327, %v1326
        %v1329 = vmul.f32 %v1323, %v1219
        %v1330 = vadd.f32 %v1328, %v1329
        %v1331 = vstv %s1221
        %vm1332 = vcmp.lt.s32.totalorder %v1331, %v352
        %v1333 = vsel %vm1332, 1, 0
        %1334 = vset.pattern.permute.xlu0 0
        %1335 = vperm.xlu0 %1334, %v1333
        %v1336 = vpop.permute.xlu0 %1335
        %vm1337 = vcmp.eq.s32.totalorder %v1336, 1
        %v1338 = vsel %vm1337, %v1330, 0.0
        %s1339 = smul.u32 %s1220, 8
        %s1340 = scalar_lea.vmem %s262, %s1339 [#allocation3]
        %1341 = vst [vmem:[%s1340] sm:$0xff] %v1338
        %v1342 = vsel %vm1337, %v1330, %v1219
        %s1343 = scalar_select %p294, 7, 0
        %s1344 = sadd.s32 %s297, %s1343
        %s1345 = smul.u32 %s1343, 3
        %s1346 = smul.addr %s1345, 8
        %s1347 = scalar_lea.vmem %s275, %s1346
        %v1348 = vld [vmem:[%s1347] sm:$0xff]
        %v1349 = vld [vmem:[%s1347 + $0x8] sm:$0xff]
        %v1350 = vld [vmem:[%s1347 + $0x10] sm:$0xff]
        %v1351 = vpack.c.bf16 %v1342, %v1342
        %1352 = vmatprep.subr.bf16.mxu0 %v465
        %1353 = vmatpush1.bf16.msra.mxu0 %v464
        %1354 = vmatprep.subr.bf16.mxu0 %v462
        %1355 = vmatpush1.bf16.msra.mxu0 %v461
        %1356 = vmatprep.subr.bf16.mxu0 %v459
        %1357 = vmatpush1.bf16.msra.mxu0 %v458
        %1358 = vmatprep.subr.bf16.mxu0 %v456
        %1359 = vmatpush1.bf16.msra.mxu0 %v455
        %1360 = vmatprep.subr.bf16.mxu0 %v453
        %1361 = vmatpush1.bf16.msra.mxu0 %v452
        %1362 = vmatprep.subr.bf16.mxu0 %v450
        %1363 = vmatpush1.bf16.msra.mxu0 %v449
        %1364 = vmatprep.subr.bf16.mxu0 %v447
        %1365 = vmatpush1.bf16.msra.mxu0 %v446
        %1366 = vmatprep.subr.bf16.mxu0 %v444
        %1367 = vmatpush1.bf16.msra.mxu0 %v443
        %1368 = vmatprep.subr.bf16.mxu0 0
        %1369 = vmatpush2.bf16.msra.mxu0 0
        %1370 = vmatprep.subr.bf16.mxu0 0
        %1371 = vmatpush2.bf16.msra.mxu0 0
        %1372 = vmatprep.subr.bf16.mxu0 0
        %1373 = vmatpush2.bf16.msra.mxu0 0
        %1374 = vmatprep.subr.bf16.mxu0 0
        %1375 = vmatpush2.bf16.msra.mxu0 0
        %1376 = vmatprep.subr.bf16.mxu0 0
        %1377 = vmatpush2.bf16.msra.mxu0 0
        %1378 = vmatprep.subr.bf16.mxu0 0
        %1379 = vmatpush2.bf16.msra.mxu0 0
        %1380 = vmatprep.subr.bf16.mxu0 0
        %1381 = vmatpush2.bf16.msra.mxu0 0
        %1382 = vmatprep.subr.bf16.mxu0 0
        %1383 = vmatpush2.bf16.msra.mxu0 0
        %1384 = vmatprep.mubr.bf16.mxu0 0
        %1385 = vmatmul.mubr.bf16.gmra.mxu0 %v1351
        %v1386 = vpop.f32.mrf.mxu0
        %v1387 = vadd.f32 %v340, %v1386
        %v1388 = vpop.f32.mrf.mxu0
        %v1389 = vadd.f32 %v344, %v1388
        %v1390 = vpop.f32.mrf.mxu0
        %v1391 = vpop.f32.mrf.mxu0
        %1392 = vdwg.mxu0
        %1393 = vmatprep.subr.bf16.mxu0 0
        %1394 = vmatpush1.bf16.msra.mxu0 %v466
        %1395 = vmatprep.subr.bf16.mxu0 0
        %1396 = vmatpush1.bf16.msra.mxu0 %v463
        %1397 = vmatprep.subr.bf16.mxu0 0
        %1398 = vmatpush1.bf16.msra.mxu0 %v460
        %1399 = vmatprep.subr.bf16.mxu0 0
        %1400 = vmatpush1.bf16.msra.mxu0 %v457
        %1401 = vmatprep.subr.bf16.mxu0 0
        %1402 = vmatpush1.bf16.msra.mxu0 %v454
        %1403 = vmatprep.subr.bf16.mxu0 0
        %1404 = vmatpush1.bf16.msra.mxu0 %v451
        %1405 = vmatprep.subr.bf16.mxu0 0
        %1406 = vmatpush1.bf16.msra.mxu0 %v448
        %1407 = vmatprep.subr.bf16.mxu0 0
        %1408 = vmatpush1.bf16.msra.mxu0 %v445
        %1409 = vmatprep.subr.bf16.mxu0 0
        %1410 = vmatpush2.bf16.msra.mxu0 0
        %1411 = vmatprep.subr.bf16.mxu0 0
        %1412 = vmatpush2.bf16.msra.mxu0 0
        %1413 = vmatprep.subr.bf16.mxu0 0
        %1414 = vmatpush2.bf16.msra.mxu0 0
        %1415 = vmatprep.subr.bf16.mxu0 0
        %1416 = vmatpush2.bf16.msra.mxu0 0
        %1417 = vmatprep.subr.bf16.mxu0 0
        %1418 = vmatpush2.bf16.msra.mxu0 0
        %1419 = vmatprep.subr.bf16.mxu0 0
        %1420 = vmatpush2.bf16.msra.mxu0 0
        %1421 = vmatprep.subr.bf16.mxu0 0
        %1422 = vmatpush2.bf16.msra.mxu0 0
        %1423 = vmatprep.subr.bf16.mxu0 0
        %1424 = vmatpush2.bf16.msra.mxu0 0
        %1425 = vmatprep.mubr.bf16.mxu0 0
        %1426 = vmatmul.mubr.bf16.gmra.mxu0 %v1351
        %v1427 = vpop.f32.mrf.mxu0
        %v1428 = vadd.f32 %v348, %v1427
        %v1429 = vpop.f32.mrf.mxu0
        %v1430 = vpop.f32.mrf.mxu0
        %v1431 = vpop.f32.mrf.mxu0
        %1432 = vdwg.mxu0
        %v1433 = vadd.f32 %v1348, %v1387
        %v1434 = vxor.u32 %v1433, 2147483648
        %v1435 = vmul.f32 %v1434, 1.442695
        %v1436 = vpow.pop %v1435
        %v1437 = vadd.f32 %v1436, 1.0
        %v1438 = vrcp.pop %v1437
        %v1439 = vmul.f32 1.0, %v1438
        %v1440 = vadd.f32 %v1349, %v1389
        %v1441 = vxor.u32 %v1440, 2147483648
        %v1442 = vmul.f32 %v1441, 1.442695
        %v1443 = vpow.pop %v1442
        %v1444 = vadd.f32 %v1443, 1.0
        %v1445 = vrcp.pop %v1444
        %v1446 = vmul.f32 1.0, %v1445
        %v1447 = vmul.f32 %v1439, %v1428
        %v1448 = vadd.f32 %v1350, %v1447
        %v1449 = vtanh.pop %v1448
        %v1450 = vsub.f32 1.0, %v1446
        %v1451 = vmul.f32 %v1450, %v1449
        %v1452 = vmul.f32 %v1446, %v1342
        %v1453 = vadd.f32 %v1451, %v1452
        %v1454 = vstv %s1344
        %vm1455 = vcmp.lt.s32.totalorder %v1454, %v352
        %v1456 = vsel %vm1455, 1, 0
        %1457 = vset.pattern.permute.xlu0 0
        %1458 = vperm.xlu0 %1457, %v1456
        %v1459 = vpop.permute.xlu0 %1458
        %vm1460 = vcmp.eq.s32.totalorder %v1459, 1
        %v1461 = vsel %vm1460, %v1453, 0.0
        %s1462 = smul.u32 %s1343, 8
        %s1463 = scalar_lea.vmem %s262, %s1462 [#allocation3]
        %1464 = vst [vmem:[%s1463] sm:$0xff] %v1461
        %v1465 = vsel %vm1460, %v1453, %v1342
        %1466 = vst [vmem:[#allocation2] sm:$0xff] %v1465
        %s1467 = sand.u32 %s150, 1
        %s1468 = sand.u32 %s150, 1
        %s1469 = smul.addr %s1468, 64
        %s1470 = scalar_lea.vmem [#allocation3], %s1469
        // Predicated region
        $region41: #{encoder_forward.2} parent=35 // pred_check
          %p1471 = pneg %p160
        $region42: #{encoder_forward.2} parent=35 // pred_check_branch
          %1473 = sbr.rel (%p1471) target = $region44
        $region43: #{encoder_forward.2} parent=35 // pred_region
          %p1474 = scmp.eq.s32.totalorder %s19, 0
          %s1475 = ssub.s32 0, %s20
          %s1476 = scalar_select %p1474, %s20, %s1475
          %s1477 = smul.u32 8, %s1476
          %s1478 = smul.addr %s1477, 2
          %s1479 = sadd.s32 %s19, %s1478
          %s1480 = smul.addr %s1479, 8
          %s1481 = scalar_lea.vmem %s4, %s1480
          // Predicated region
          $region45: #{encoder_forward.2} parent=43 // pred_check
            _
          $region46: #{encoder_forward.2} parent=43 // pred_check_branch
            %1483 = sbr.rel (0) target = $region48
          $region47: #{encoder_forward.2} parent=43 // pred_region
            // Predicated region
            $region49: #{encoder_forward.2} parent=47 // pred_check
              _
            $region50: #{encoder_forward.2} parent=47 // pred_check_branch
              %1485 = sbr.rel (0) target = $region52
            $region51: #{encoder_forward.2} parent=47 // pred_region
              // Predicated region
              $region64: #{encoder_forward.2} parent=51 // pred_check
                _
              $region65: #{encoder_forward.2} parent=51 // pred_check_branch
                %1515 = sbr.rel (0) target = $region67
              $region66: #{encoder_forward.2} parent=51 // pred_region
                loop: start=0, step=1, limit=1
                $region68: #{encoder_forward.2} parent=66 // loop_pre_header
                  _
                $region69: #{encoder_forward.2} parent=66 // loop_header
                  %s1517 = sphi 0, %s1521
                  %p1518 = scmp.ge.s32.totalorder %s1517, 1
                  %s1522 = sphi %s1470, %s1470
                  %s1523 = sphi %s1481, %s1481
                $region70: #{encoder_forward.2} parent=66 // loop_header_branch
                  %1520 = sbr.rel (%p1518) target = $region74
                $region71: #{encoder_forward.2} parent=66 // loop_body
                  %v1524 = vld [vmem:[%s1522] sm:$0xff]
                  %1525 = vst [vmem:[%s1523] sm:$0xff] %v1524
                  %v1526 = vld [vmem:[%s1522 + $0x8] sm:$0xff]
                  %1527 = vst [vmem:[%s1523 + $0x10] sm:$0xff] %v1526
                  %v1528 = vld [vmem:[%s1522 + $0x10] sm:$0xff]
                  %1529 = vst [vmem:[%s1523 + $0x20] sm:$0xff] %v1528
                  %v1530 = vld [vmem:[%s1522 + $0x18] sm:$0xff]
                  %1531 = vst [vmem:[%s1523 + $0x30] sm:$0xff] %v1530
                  %v1532 = vld [vmem:[%s1522 + $0x20] sm:$0xff]
                  %1533 = vst [vmem:[%s1523 + $0x40] sm:$0xff] %v1532
                  %v1534 = vld [vmem:[%s1522 + $0x28] sm:$0xff]
                  %1535 = vst [vmem:[%s1523 + $0x50] sm:$0xff] %v1534
                  %v1536 = vld [vmem:[%s1522 + $0x30] sm:$0xff]
                  %1537 = vst [vmem:[%s1523 + $0x60] sm:$0xff] %v1536
                  %v1538 = vld [vmem:[%s1522 + $0x38] sm:$0xff]
                  %1539 = vst [vmem:[%s1523 + $0x70] sm:$0xff] %v1538
                $region72: #{encoder_forward.2} parent=66 // loop_footer
                  %s1521 = sadd.s32 1, %s1517
                $region73: #{encoder_forward.2} parent=66 // loop_footer_branch
                  %1516 = sbr.rel target = $region69
                $region74: #{encoder_forward.2} parent=66 // loop_exit
                  _
              $region67: #{encoder_forward.2} parent=51 // pred_fallthru
                _
              // Predicated region
              $region75: #{encoder_forward.2} parent=51 // pred_check
                _
              $region76: #{encoder_forward.2} parent=51 // pred_check_branch
                %1541 = sbr.rel target = $region78
              $region77: #{encoder_forward.2} parent=51 // pred_region
                _
              $region78: #{encoder_forward.2} parent=51 // pred_fallthru
                _
            $region52: #{encoder_forward.2} parent=47 // pred_fallthru
              _
            // Predicated region
            $region53: #{encoder_forward.2} parent=47 // pred_check
              _
            $region54: #{encoder_forward.2} parent=47 // pred_check_branch
              %1487 = sbr.rel target = $region56
            $region55: #{encoder_forward.2} parent=47 // pred_region
              %s1489 = ssub.s32 256, 1
              loop: start=0, step=1, limit=1
              $region57: #{encoder_forward.2} parent=55 // loop_pre_header
                _
              $region58: #{encoder_forward.2} parent=55 // loop_header
                %s1491 = sphi 0, %s1495
                %p1492 = scmp.ge.s32.totalorder %s1491, 1
                %s1496 = sphi %s1470, %s1470
                %s1497 = sphi %s1481, %s1481
              $region59: #{encoder_forward.2} parent=55 // loop_header_branch
                %1494 = sbr.rel (%p1492) target = $region63
              $region60: #{encoder_forward.2} parent=55 // loop_body
                %v1498 = vld [vmem:[%s1496] sm:%s1489]
                %1499 = vst [vmem:[%s1497] sm:%s1489] %v1498
                %v1500 = vld [vmem:[%s1496 + $0x8] sm:%s1489]
                %1501 = vst [vmem:[%s1497 + $0x10] sm:%s1489] %v1500
                %v1502 = vld [vmem:[%s1496 + $0x10] sm:%s1489]
                %1503 = vst [vmem:[%s1497 + $0x20] sm:%s1489] %v1502
                %v1504 = vld [vmem:[%s1496 + $0x18] sm:%s1489]
                %1505 = vst [vmem:[%s1497 + $0x30] sm:%s1489] %v1504
                %v1506 = vld [vmem:[%s1496 + $0x20] sm:%s1489]
                %1507 = vst [vmem:[%s1497 + $0x40] sm:%s1489] %v1506
                %v1508 = vld [vmem:[%s1496 + $0x28] sm:%s1489]
                %1509 = vst [vmem:[%s1497 + $0x50] sm:%s1489] %v1508
                %v1510 = vld [vmem:[%s1496 + $0x30] sm:%s1489]
                %1511 = vst [vmem:[%s1497 + $0x60] sm:%s1489] %v1510
                %v1512 = vld [vmem:[%s1496 + $0x38] sm:%s1489]
                %1513 = vst [vmem:[%s1497 + $0x70] sm:%s1489] %v1512
              $region61: #{encoder_forward.2} parent=55 // loop_footer
                %s1495 = sadd.s32 1, %s1491
              $region62: #{encoder_forward.2} parent=55 // loop_footer_branch
                %1490 = sbr.rel target = $region58
              $region63: #{encoder_forward.2} parent=55 // loop_exit
                _
            $region56: #{encoder_forward.2} parent=47 // pred_fallthru
              _
          $region48: #{encoder_forward.2} parent=43 // pred_fallthru
            _
          %1542 = vnop
        $region44: #{encoder_forward.2} parent=35 // pred_fallthru
          _
      $region36: #{encoder_forward.2} parent=5 // pred_fallthru
        _
      %p1543 = scmp.le.s32.totalorder 2, %s10
      // Predicated region
      $region79: #{encoder_forward.2} parent=5 // pred_check
        %p1544 = pneg %p1543
      $region80: #{encoder_forward.2} parent=5 // pred_check_branch
        %1546 = sbr.rel (%p1544) target = $region82
      $region81: #{encoder_forward.2} parent=5 // pred_region
        %s1547 = ssub.s32 %s10, 2
        // Predicated region
        $region83: #{encoder_forward.2} parent=81 // pred_check
          %p1548 = pneg %p166
        $region84: #{encoder_forward.2} parent=81 // pred_check_branch
          %1550 = sbr.rel (%p1548) target = $region86
        $region85: #{encoder_forward.2} parent=81 // pred_region
          %s1551 = sand.u32 %s151, 1
          %s1552 = sand.u32 %s151, 1
          %s1553 = smul.addr %s1552, 64
          %s1554 = scalar_lea.vmem [#allocation3], %s1553
        $region86: #{encoder_forward.2} parent=81 // pred_fallthru
          _
      $region82: #{encoder_forward.2} parent=5 // pred_fallthru
        _
    $region6: #{encoder_forward.2} parent=1 // loop_footer
      %s14 = sadd.s32 1, %s10
    $region7: #{encoder_forward.2} parent=1 // loop_footer_branch
      %9 = sbr.rel target = $region3
    $region8: #{encoder_forward.2} parent=1 // loop_exit
      _

</llo_original>
